<compile_context>
chip_gen: v5e
topology: v5e:2x2
jax: 0.10.0
libtpu: 0.0.40
codegen_flags: <defaults>
</compile_context>

<pallas_src>
import jax
import jax.numpy as jnp
from jax import lax
from jax.experimental import pallas as pl
from jax.experimental.pallas import tpu as pltpu  # noqa: F401  (TPU backend)

EMBED = 32
HEADS = 4
HEAD_DIM = EMBED // HEADS
FWD_EXP = 4
FF_HIDDEN = FWD_EXP * EMBED
SEQ = 8
BATCH = 2
NS = BATCH * SEQ          # batch folded onto sublanes
HNS = HEADS * NS          # head-stacked rows
LN_EPS = 1e-5

# Row layout of the packed 32-lane weight slab `w_e` (lanes = EMBED):
ROW_A1 = 0                         # [Wq|Wk|Wv|Wo] for self-attention, 4*E rows
ROW_A2 = 4 * EMBED                 # [Wq|Wk|Wv|Wo] for cross-attention
ROW_FF_W2 = 8 * EMBED              # ff w2.T  (FF_HIDDEN, E)
ROW_HMASK = ROW_FF_W2 + FF_HIDDEN  # head-ownership mask (HNS, E)
ROW_SMALL = ROW_HMASK + HNS        # 9 rows: g0,b0,g1,b1,g2,b2, a1_bo, a2_bo, ff_b2
W_E_ROWS = ROW_SMALL + 9


# ------------------------------ fused kernel -------------------------------- #

def _decoder_block_kernel(acts_ref, bias_ref, w_e_ref, w_ff1_ref, o_ref):
    """Whole DecoderBlock forward, all batch elements at once.

    acts:  (3*NS, E)  = [x; value; key], batch folded onto rows (row = n*S+s).
    bias:  (2*HNS, NS) = [trg_bias; src_bias] additive logits bias
           (0 = attend, -1e20 = masked, -1e30 = cross-batch block).
    w_e:   (W_E_ROWS, E) packed weights / constants (see ROW_* layout).
    w_ff1: (E+1, FF_HIDDEN) = [w1.T; b1].
    """
    f32 = jnp.float32

    x = acts_ref[0 * NS:1 * NS, :]
    val = acts_ref[1 * NS:2 * NS, :]
    key = acts_ref[2 * NS:3 * NS, :]

    trg_bias = bias_ref[0:HNS, :]
    src_bias = bias_ref[HNS:2 * HNS, :]

    head_mask = w_e_ref[ROW_HMASK:ROW_HMASK + HNS, :]          # (HNS, E)
    small = w_e_ref[ROW_SMALL:ROW_SMALL + 9, :]                # (9, E)
    ln_g = (small[0:1, :], small[2:3, :], small[4:5, :])
    ln_b = (small[1:2, :], small[3:4, :], small[5:6, :])
    a1_bo, a2_bo, ff_b2 = small[6:7, :], small[7:8, :], small[8:9, :]

    def attention(q_in, k_in, v_in, bias, row0, bo):
        wq = w_e_ref[row0 + 0 * EMBED:row0 + 1 * EMBED, :]     # 1/sqrt(E) folded in
        wk = w_e_ref[row0 + 1 * EMBED:row0 + 2 * EMBED, :]
        wv = w_e_ref[row0 + 2 * EMBED:row0 + 3 * EMBED, :]
        wo = w_e_ref[row0 + 3 * EMBED:row0 + 4 * EMBED, :]
        q = jnp.dot(q_in, wq, preferred_element_type=f32)      # (NS, E)
        k = jnp.dot(k_in, wk, preferred_element_type=f32)      # (NS, E)
        v = jnp.dot(v_in, wv, preferred_element_type=f32)      # (NS, E)
        # Heads stacked on sublanes: one 2D matmul computes all per-head,
        # per-batch energies; the additive bias blocks masked and cross-batch
        # entries (they become exactly 0 after softmax).
        q_rep = jnp.tile(q, (HEADS, 1)) * head_mask            # (HNS, E)
        energy = lax.dot_general(q_rep, k, (((1,), (1,)), ((), ())),
                                 preferred_element_type=f32) + bias   # (HNS, NS)
        m = jnp.max(energy, axis=-1, keepdims=True)
        e = jnp.exp(energy - m)
        p = e * pl.reciprocal(jnp.sum(e, axis=-1, keepdims=True), approx=True)
        ctx = jnp.dot(p, v, preferred_element_type=f32) * head_mask   # (HNS, E)
        out = ctx[0:NS, :]
        for h in range(1, HEADS):                               # cheap VPU adds
            out = out + ctx[h * NS:(h + 1) * NS, :]
        return jnp.dot(out, wo, preferred_element_type=f32) + bo

    def layernorm(t, i):
        mu = jnp.mean(t, axis=-1, keepdims=True)
        tc = t - mu
        var = jnp.mean(tc * tc, axis=-1, keepdims=True)
        return tc * lax.rsqrt(var + LN_EPS) * ln_g[i] + ln_b[i]

    # ---- masked self-attention + DecoderBlock.norm (dropout = identity) ----
    attn1 = attention(x, x, x, trg_bias, ROW_A1, a1_bo)
    query = layernorm(attn1 + x, 0)

    # ---- cross-attention + TransformerBlock.norm1 ----
    attn2 = attention(query, key, val, src_bias, ROW_A2, a2_bo)
    x2 = layernorm(attn2 + query, 1)

    # ---- feed-forward (Linear -> ReLU -> Linear) + norm2 ----
    ff_w1t = w_ff1_ref[0:EMBED, :]
    ff_b1 = w_ff1_ref[EMBED:EMBED + 1, :]
    h = jnp.maximum(jnp.dot(x2, ff_w1t, preferred_element_type=f32) + ff_b1, 0.0)
    ff_w2t = w_e_ref[ROW_FF_W2:ROW_FF_W2 + FF_HIDDEN, :]
    ff = jnp.dot(h, ff_w2t, preferred_element_type=f32) + ff_b2
    o_ref[...] = layernorm(ff + x2, 2).astype(o_ref.dtype)


# ------------------------------ wrapper -------------------------------------- #

def _attn_bias(mask):
    """(N,S,S) float mask -> (HEADS*N*S, N*S) additive bias for the folded layout."""
    n, s, _ = mask.shape
    attn = jnp.where(mask == 0, jnp.float32(-1e20), jnp.float32(0.0))     # (N,S,S)
    same = (jnp.arange(n)[:, None, None, None] ==
            jnp.arange(n)[None, None, :, None])                           # (N,1,N,1)
    big = jnp.where(same, attn[:, :, None, :], jnp.float32(-1e30))        # (N,S,N,S)
    big = big.reshape(n * s, n * s)
    return jnp.tile(big, (HEADS, 1))                                      # (H*N*S, N*S)


@jax.jit
def decoder_block_pallas(x, value, key_seq, src_mask, trg_mask, prepped):
    n, s, e = x.shape                      # must match BATCH, SEQ, EMBED
    acts = jnp.concatenate([x.reshape(n * s, e),
                            value.reshape(n * s, e),
                            key_seq.reshape(n * s, e)], axis=0)           # (3*NS, E)
    bias = jnp.concatenate([_attn_bias(trg_mask), _attn_bias(src_mask)],
                           axis=0).astype(jnp.float32)                    # (2*HNS, NS)

    out = pl.pallas_call(
        _decoder_block_kernel,
        out_shape=jax.ShapeDtypeStruct((n * s, e), x.dtype),
        # No grid: single invocation, full arrays resident in VMEM (tiny).
    )(acts, bias, prepped["w_e"], prepped["w_ff1"])
    return out.reshape(n, s, e)


# ------------------------------ parameters ----------------------------------- #

def init_params(key):
    ks = jax.random.split(key, 8)

    def lin(k, shape, scale=0.05):
        return jax.random.normal(k, shape, jnp.float32) * scale

    def attn_params(k):
        k1, k2, k3, k4, k5 = jax.random.split(k, 5)
        return dict(wv=lin(k1, (HEAD_DIM, HEAD_DIM)),
                    wk=lin(k2, (HEAD_DIM, HEAD_DIM)),
                    wq=lin(k3, (HEAD_DIM, HEAD_DIM)),
                    wo=lin(k4, (EMBED, EMBED)),
                    bo=lin(k5, (EMBED,)))

    return dict(
        attn1=attn_params(ks[0]),                        # DecoderBlock.attention
        norm=(jnp.ones((EMBED,)), jnp.zeros((EMBED,))),  # DecoderBlock.norm
        attn2=attn_params(ks[1]),                        # TransformerBlock.attention
        norm1=(jnp.ones((EMBED,)), jnp.zeros((EMBED,))),
        norm2=(jnp.ones((EMBED,)), jnp.zeros((EMBED,))),
        ff=dict(w1=lin(ks[2], (FF_HIDDEN, EMBED)), b1=lin(ks[3], (FF_HIDDEN,)),
                w2=lin(ks[4], (EMBED, FF_HIDDEN)), b2=lin(ks[5], (EMBED,))),
    )


def prepare_params(params):
    """One-time weight prep (kron / transpose / pack) done OUTSIDE the hot path."""
    eye = jnp.eye(HEADS, dtype=jnp.float32)
    inv_scale = jnp.float32(1.0 / (float(EMBED) ** 0.5))

    def big(w):                      # per-head (D,D) -> block-diag (E,E), applied as x @ big
        return jnp.kron(eye, w.T)

    def attn_rows(p):
        return [big(p["wq"]) * inv_scale,   # fold 1/sqrt(E) into Wq (exact, pre-softmax)
                big(p["wk"]), big(p["wv"]), p["wo"].T]

    # head_mask[h*NS + r, e] = 1 iff column e belongs to head h
    row_head = jnp.arange(HNS)[:, None] // NS
    col_head = jnp.arange(EMBED)[None, :] // HEAD_DIM
    head_mask = (row_head == col_head).astype(jnp.float32)            # (HNS, E)

    ff = params["ff"]
    small = jnp.stack([params["norm"][0], params["norm"][1],
                       params["norm1"][0], params["norm1"][1],
                       params["norm2"][0], params["norm2"][1],
                       params["attn1"]["bo"], params["attn2"]["bo"],
                       ff["b2"]], axis=0)                              # (9, E)

    w_e = jnp.concatenate(attn_rows(params["attn1"]) + attn_rows(params["attn2"])
                          + [ff["w2"].T, head_mask, small], axis=0)
    assert w_e.shape == (W_E_ROWS, EMBED)

    w_ff1 = jnp.concatenate([ff["w1"].T, ff["b1"].reshape(1, FF_HIDDEN)], axis=0)
    return dict(w_e=w_e.astype(jnp.float32), w_ff1=w_ff1.astype(jnp.float32))


# ------------------------------ pure-JAX reference --------------------------- #

def _ref_self_attention(values, keys, query, mask, p):
    n, s, e = query.shape
    v = values.reshape(n, s, HEADS, HEAD_DIM) @ p["wv"].T
    k = keys.reshape(n, s, HEADS, HEAD_DIM) @ p["wk"].T
    q = query.reshape(n, s, HEADS, HEAD_DIM) @ p["wq"].T
    energy = jnp.einsum("nqhd,nkhd->nhqk", q, k)
    energy = jnp.where(mask[:, None, :, :] == 0, -1e20, energy)
    attn = jax.nn.softmax(energy / (e ** 0.5), axis=3)
    out = jnp.einsum("nhqk,nkhd->nqhd", attn, v).reshape(n, s, e)
    return out @ p["wo"].T + p["bo"]


def _ref_ln(x, p):
    g, b = p
    mu = jnp.mean(x, axis=-1, keepdims=True)
    var = jnp.mean((x - mu) ** 2, axis=-1, keepdims=True)
    return (x - mu) / jnp.sqrt(var + LN_EPS) * g + b


def decoder_block_ref(x, value, key_seq, src_mask, trg_mask, params):
    attention = _ref_self_attention(x, x, x, trg_mask, params["attn1"])
    query = _ref_ln(attention + x, params["norm"])
    attn2 = _ref_self_attention(value, key_seq, query, src_mask, params["attn2"])
    x2 = _ref_ln(attn2 + query, params["norm1"])
    ffp = params["ff"]
    ff = jnp.maximum(x2 @ ffp["w1"].T + ffp["b1"], 0.0) @ ffp["w2"].T + ffp["b2"]
    return _ref_ln(ff + x2, params["norm2"])


# ------------------------------ main ----------------------------------------- #

if __name__ == "__main__":
    root = jax.random.PRNGKey(0)
    kx, kv, kk, kp = jax.random.split(root, 4)

    x = jax.random.normal(kx, (BATCH, SEQ, EMBED), jnp.float32)
    value = jax.random.normal(kv, (BATCH, SEQ, EMBED), jnp.float32)
    key_seq = jax.random.normal(kk, (BATCH, SEQ, EMBED), jnp.float32)
    # target mask: causal; source mask: all ones (broadcast over heads)
    trg_mask = jnp.broadcast_to(jnp.tril(jnp.ones((SEQ, SEQ), jnp.float32)),
                                (BATCH, SEQ, SEQ))
    src_mask = jnp.ones((BATCH, SEQ, SEQ), jnp.float32)

    params = init_params(kp)
    prepped = prepare_params(params)   # hoisted: done once, not per forward

    out = decoder_block_pallas(x, value, key_seq, src_mask, trg_mask, prepped)
    out = jax.block_until_ready(out)

    ref = decoder_block_ref(x, value, key_seq, src_mask, trg_mask, params)
    assert out.shape == (BATCH, SEQ, EMBED)
    # tolerance slightly relaxed vs an exact-divide softmax because the kernel
    # uses the EUP approximate reciprocal (still far tighter than any real bug).
    assert jnp.allclose(out, ref, atol=2e-3, rtol=2e-3), (
        f"max abs err = {float(jnp.max(jnp.abs(out - ref)))}")

    print("KERNEL_OK")
</pallas_src>

<mosaic_0001>
module attributes {stable_mosaic.version = 11 : i64} {
  func.func @_decoder_block_kernel(%arg0: memref<48x32xf32, #tpu.memory_space<vmem>>, %arg1: memref<128x16xf32, #tpu.memory_space<vmem>>, %arg2: memref<457x32xf32, #tpu.memory_space<vmem>>, %arg3: memref<33x128xf32, #tpu.memory_space<vmem>>, %arg4: memref<16x32xf32, #tpu.memory_space<vmem>>) attributes {dimension_semantics = [], scalar_prefetch = 0 : i64, scratch_operands = 0 : i64, tpu.core_type = #tpu.core_type<tc>} {
    %c0 = arith.constant 0 : index
    %c0_0 = arith.constant 0 : index
    %0 = vector.load %arg0[%c0, %c0_0] : memref<48x32xf32, #tpu.memory_space<vmem>>, vector<16x32xf32>
    %c16 = arith.constant 16 : index
    %c0_1 = arith.constant 0 : index
    %1 = vector.load %arg0[%c16, %c0_1] : memref<48x32xf32, #tpu.memory_space<vmem>>, vector<16x32xf32>
    %c32 = arith.constant 32 : index
    %c0_2 = arith.constant 0 : index
    %2 = vector.load %arg0[%c32, %c0_2] : memref<48x32xf32, #tpu.memory_space<vmem>>, vector<16x32xf32>
    %c0_3 = arith.constant 0 : index
    %c0_4 = arith.constant 0 : index
    %3 = vector.load %arg1[%c0_3, %c0_4] : memref<128x16xf32, #tpu.memory_space<vmem>>, vector<64x16xf32>
    %c64 = arith.constant 64 : index
    %c0_5 = arith.constant 0 : index
    %4 = vector.load %arg1[%c64, %c0_5] : memref<128x16xf32, #tpu.memory_space<vmem>>, vector<64x16xf32>
    %c384 = arith.constant 384 : index
    %c0_6 = arith.constant 0 : index
    %5 = vector.load %arg2[%c384, %c0_6] : memref<457x32xf32, #tpu.memory_space<vmem>>, vector<64x32xf32>
    %c448 = arith.constant 448 : index
    %c0_7 = arith.constant 0 : index
    %6 = vector.load %arg2[%c448, %c0_7] : memref<457x32xf32, #tpu.memory_space<vmem>>, vector<9x32xf32>
    %7 = vector.extract_strided_slice %6 {offsets = [0, 0], sizes = [1, 32], strides = [1, 1]} : vector<9x32xf32> to vector<1x32xf32>
    %8 = vector.extract_strided_slice %6 {offsets = [2, 0], sizes = [1, 32], strides = [1, 1]} : vector<9x32xf32> to vector<1x32xf32>
    %9 = vector.extract_strided_slice %6 {offsets = [4, 0], sizes = [1, 32], strides = [1, 1]} : vector<9x32xf32> to vector<1x32xf32>
    %10 = vector.extract_strided_slice %6 {offsets = [1, 0], sizes = [1, 32], strides = [1, 1]} : vector<9x32xf32> to vector<1x32xf32>
    %11 = vector.extract_strided_slice %6 {offsets = [3, 0], sizes = [1, 32], strides = [1, 1]} : vector<9x32xf32> to vector<1x32xf32>
    %12 = vector.extract_strided_slice %6 {offsets = [5, 0], sizes = [1, 32], strides = [1, 1]} : vector<9x32xf32> to vector<1x32xf32>
    %13 = vector.extract_strided_slice %6 {offsets = [6, 0], sizes = [1, 32], strides = [1, 1]} : vector<9x32xf32> to vector<1x32xf32>
    %14 = vector.extract_strided_slice %6 {offsets = [7, 0], sizes = [1, 32], strides = [1, 1]} : vector<9x32xf32> to vector<1x32xf32>
    %15 = vector.extract_strided_slice %6 {offsets = [8, 0], sizes = [1, 32], strides = [1, 1]} : vector<9x32xf32> to vector<1x32xf32>
    %c0_8 = arith.constant 0 : index
    %c0_9 = arith.constant 0 : index
    %16 = vector.load %arg2[%c0_8, %c0_9] : memref<457x32xf32, #tpu.memory_space<vmem>>, vector<32x32xf32>
    %c32_10 = arith.constant 32 : index
    %c0_11 = arith.constant 0 : index
    %17 = vector.load %arg2[%c32_10, %c0_11] : memref<457x32xf32, #tpu.memory_space<vmem>>, vector<32x32xf32>
    %c64_12 = arith.constant 64 : index
    %c0_13 = arith.constant 0 : index
    %18 = vector.load %arg2[%c64_12, %c0_13] : memref<457x32xf32, #tpu.memory_space<vmem>>, vector<32x32xf32>
    %c96 = arith.constant 96 : index
    %c0_14 = arith.constant 0 : index
    %19 = vector.load %arg2[%c96, %c0_14] : memref<457x32xf32, #tpu.memory_space<vmem>>, vector<32x32xf32>
    %cst = arith.constant dense<0.000000e+00> : vector<16x32xf32>
    %20 = tpu.matmul %0, %16, %cst {dimension_numbers = #tpu.dot_dimension_numbers<[1], [0], [0], [1], [0, 0, 1, 1], [], []>} : vector<16x32xf32>, vector<32x32xf32>, vector<16x32xf32> -> vector<16x32xf32>
    %cst_15 = arith.constant dense<0.000000e+00> : vector<16x32xf32>
    %21 = tpu.matmul %0, %17, %cst_15 {dimension_numbers = #tpu.dot_dimension_numbers<[1], [0], [0], [1], [0, 0, 1, 1], [], []>} : vector<16x32xf32>, vector<32x32xf32>, vector<16x32xf32> -> vector<16x32xf32>
    %cst_16 = arith.constant dense<0.000000e+00> : vector<16x32xf32>
    %22 = tpu.matmul %0, %18, %cst_16 {dimension_numbers = #tpu.dot_dimension_numbers<[1], [0], [0], [1], [0, 0, 1, 1], [], []>} : vector<16x32xf32>, vector<32x32xf32>, vector<16x32xf32> -> vector<16x32xf32>
    %23 = tpu.concatenate %20, %20, %20, %20 in 0 : vector<16x32xf32>, vector<16x32xf32>, vector<16x32xf32>, vector<16x32xf32> -> vector<64x32xf32>
    %24 = arith.mulf %23, %5 : vector<64x32xf32>
    %cst_17 = arith.constant dense<0.000000e+00> : vector<64x16xf32>
    %25 = tpu.matmul %24, %21, %cst_17 {dimension_numbers = #tpu.dot_dimension_numbers<[1], [1], [0], [0], [0, 0, 1, 0], [], []>} : vector<64x32xf32>, vector<16x32xf32>, vector<64x16xf32> -> vector<64x16xf32>
    %26 = arith.addf %25, %3 : vector<64x16xf32>
    %cst_18 = arith.constant dense<0xFF800000> : vector<64xf32>
    %27 = vector.multi_reduction <maximumf>, %26, %cst_18 [1] : vector<64x16xf32> to vector<64xf32>
    %28 = vector.shape_cast %27 : vector<64xf32> to vector<64x1xf32>
    %29 = vector.broadcast %28 : vector<64x1xf32> to vector<64x16xf32>
    %30 = arith.subf %26, %29 : vector<64x16xf32>
    %31 = math.exp %30 : vector<64x16xf32>
    %cst_19 = arith.constant dense<0.000000e+00> : vector<64xf32>
    %32 = vector.multi_reduction <add>, %31, %cst_19 [1] : vector<64x16xf32> to vector<64xf32>
    %33 = vector.shape_cast %32 : vector<64xf32> to vector<64x1xf32>
    %34 = tpu.reciprocal %33 {approx = true} : vector<64x1xf32> -> vector<64x1xf32>
    %35 = vector.broadcast %34 : vector<64x1xf32> to vector<64x16xf32>
    %36 = arith.mulf %31, %35 : vector<64x16xf32>
    %cst_20 = arith.constant dense<0.000000e+00> : vector<64x32xf32>
    %37 = tpu.matmul %36, %22, %cst_20 {dimension_numbers = #tpu.dot_dimension_numbers<[1], [0], [0], [1], [0, 0, 1, 1], [], []>} : vector<64x16xf32>, vector<16x32xf32>, vector<64x32xf32> -> vector<64x32xf32>
    %38 = arith.mulf %37, %5 : vector<64x32xf32>
    %39 = vector.extract_strided_slice %38 {offsets = [0, 0], sizes = [16, 32], strides = [1, 1]} : vector<64x32xf32> to vector<16x32xf32>
    %40 = vector.extract_strided_slice %38 {offsets = [16, 0], sizes = [16, 32], strides = [1, 1]} : vector<64x32xf32> to vector<16x32xf32>
    %41 = arith.addf %39, %40 : vector<16x32xf32>
    %42 = vector.extract_strided_slice %38 {offsets = [32, 0], sizes = [16, 32], strides = [1, 1]} : vector<64x32xf32> to vector<16x32xf32>
    %43 = arith.addf %41, %42 : vector<16x32xf32>
    %44 = vector.extract_strided_slice %38 {offsets = [48, 0], sizes = [16, 32], strides = [1, 1]} : vector<64x32xf32> to vector<16x32xf32>
    %45 = arith.addf %43, %44 : vector<16x32xf32>
    %cst_21 = arith.constant dense<0.000000e+00> : vector<16x32xf32>
    %46 = tpu.matmul %45, %19, %cst_21 {dimension_numbers = #tpu.dot_dimension_numbers<[1], [0], [0], [1], [0, 0, 1, 1], [], []>} : vector<16x32xf32>, vector<32x32xf32>, vector<16x32xf32> -> vector<16x32xf32>
    %47 = vector.broadcast %13 : vector<1x32xf32> to vector<16x32xf32>
    %48 = arith.addf %46, %47 : vector<16x32xf32>
    %49 = arith.addf %48, %0 : vector<16x32xf32>
    %cst_22 = arith.constant dense<0.000000e+00> : vector<16xf32>
    %50 = vector.multi_reduction <add>, %49, %cst_22 [1] : vector<16x32xf32> to vector<16xf32>
    %51 = vector.shape_cast %50 : vector<16xf32> to vector<16x1xf32>
    %cst_23 = arith.constant 3.200000e+01 : f32
    %52 = vector.broadcast %cst_23 : f32 to vector<16x1xf32>
    %53 = arith.divf %51, %52 : vector<16x1xf32>
    %54 = vector.broadcast %53 : vector<16x1xf32> to vector<16x32xf32>
    %55 = arith.subf %49, %54 : vector<16x32xf32>
    %56 = arith.mulf %55, %55 : vector<16x32xf32>
    %cst_24 = arith.constant dense<0.000000e+00> : vector<16xf32>
    %57 = vector.multi_reduction <add>, %56, %cst_24 [1] : vector<16x32xf32> to vector<16xf32>
    %58 = vector.shape_cast %57 : vector<16xf32> to vector<16x1xf32>
    %cst_25 = arith.constant 3.200000e+01 : f32
    %59 = vector.broadcast %cst_25 : f32 to vector<16x1xf32>
    %60 = arith.divf %58, %59 : vector<16x1xf32>
    %cst_26 = arith.constant 9.99999974E-6 : f32
    %61 = vector.broadcast %cst_26 : f32 to vector<16x1xf32>
    %62 = arith.addf %60, %61 : vector<16x1xf32>
    %63 = math.rsqrt %62 : vector<16x1xf32>
    %64 = vector.broadcast %63 : vector<16x1xf32> to vector<16x32xf32>
    %65 = arith.mulf %55, %64 : vector<16x32xf32>
    %66 = vector.broadcast %7 : vector<1x32xf32> to vector<16x32xf32>
    %67 = arith.mulf %65, %66 : vector<16x32xf32>
    %68 = vector.broadcast %10 : vector<1x32xf32> to vector<16x32xf32>
    %69 = arith.addf %67, %68 : vector<16x32xf32>
    %c128 = arith.constant 128 : index
    %c0_27 = arith.constant 0 : index
    %70 = vector.load %arg2[%c128, %c0_27] : memref<457x32xf32, #tpu.memory_space<vmem>>, vector<32x32xf32>
    %c160 = arith.constant 160 : index
    %c0_28 = arith.constant 0 : index
    %71 = vector.load %arg2[%c160, %c0_28] : memref<457x32xf32, #tpu.memory_space<vmem>>, vector<32x32xf32>
    %c192 = arith.constant 192 : index
    %c0_29 = arith.constant 0 : index
    %72 = vector.load %arg2[%c192, %c0_29] : memref<457x32xf32, #tpu.memory_space<vmem>>, vector<32x32xf32>
    %c224 = arith.constant 224 : index
    %c0_30 = arith.constant 0 : index
    %73 = vector.load %arg2[%c224, %c0_30] : memref<457x32xf32, #tpu.memory_space<vmem>>, vector<32x32xf32>
    %cst_31 = arith.constant dense<0.000000e+00> : vector<16x32xf32>
    %74 = tpu.matmul %69, %70, %cst_31 {dimension_numbers = #tpu.dot_dimension_numbers<[1], [0], [0], [1], [0, 0, 1, 1], [], []>} : vector<16x32xf32>, vector<32x32xf32>, vector<16x32xf32> -> vector<16x32xf32>
    %cst_32 = arith.constant dense<0.000000e+00> : vector<16x32xf32>
    %75 = tpu.matmul %2, %71, %cst_32 {dimension_numbers = #tpu.dot_dimension_numbers<[1], [0], [0], [1], [0, 0, 1, 1], [], []>} : vector<16x32xf32>, vector<32x32xf32>, vector<16x32xf32> -> vector<16x32xf32>
    %cst_33 = arith.constant dense<0.000000e+00> : vector<16x32xf32>
    %76 = tpu.matmul %1, %72, %cst_33 {dimension_numbers = #tpu.dot_dimension_numbers<[1], [0], [0], [1], [0, 0, 1, 1], [], []>} : vector<16x32xf32>, vector<32x32xf32>, vector<16x32xf32> -> vector<16x32xf32>
    %77 = tpu.concatenate %74, %74, %74, %74 in 0 : vector<16x32xf32>, vector<16x32xf32>, vector<16x32xf32>, vector<16x32xf32> -> vector<64x32xf32>
    %78 = arith.mulf %77, %5 : vector<64x32xf32>
    %cst_34 = arith.constant dense<0.000000e+00> : vector<64x16xf32>
    %79 = tpu.matmul %78, %75, %cst_34 {dimension_numbers = #tpu.dot_dimension_numbers<[1], [1], [0], [0], [0, 0, 1, 0], [], []>} : vector<64x32xf32>, vector<16x32xf32>, vector<64x16xf32> -> vector<64x16xf32>
    %80 = arith.addf %79, %4 : vector<64x16xf32>
    %cst_35 = arith.constant dense<0xFF800000> : vector<64xf32>
    %81 = vector.multi_reduction <maximumf>, %80, %cst_35 [1] : vector<64x16xf32> to vector<64xf32>
    %82 = vector.shape_cast %81 : vector<64xf32> to vector<64x1xf32>
    %83 = vector.broadcast %82 : vector<64x1xf32> to vector<64x16xf32>
    %84 = arith.subf %80, %83 : vector<64x16xf32>
    %85 = math.exp %84 : vector<64x16xf32>
    %cst_36 = arith.constant dense<0.000000e+00> : vector<64xf32>
    %86 = vector.multi_reduction <add>, %85, %cst_36 [1] : vector<64x16xf32> to vector<64xf32>
    %87 = vector.shape_cast %86 : vector<64xf32> to vector<64x1xf32>
    %88 = tpu.reciprocal %87 {approx = true} : vector<64x1xf32> -> vector<64x1xf32>
    %89 = vector.broadcast %88 : vector<64x1xf32> to vector<64x16xf32>
    %90 = arith.mulf %85, %89 : vector<64x16xf32>
    %cst_37 = arith.constant dense<0.000000e+00> : vector<64x32xf32>
    %91 = tpu.matmul %90, %76, %cst_37 {dimension_numbers = #tpu.dot_dimension_numbers<[1], [0], [0], [1], [0, 0, 1, 1], [], []>} : vector<64x16xf32>, vector<16x32xf32>, vector<64x32xf32> -> vector<64x32xf32>
    %92 = arith.mulf %91, %5 : vector<64x32xf32>
    %93 = vector.extract_strided_slice %92 {offsets = [0, 0], sizes = [16, 32], strides = [1, 1]} : vector<64x32xf32> to vector<16x32xf32>
    %94 = vector.extract_strided_slice %92 {offsets = [16, 0], sizes = [16, 32], strides = [1, 1]} : vector<64x32xf32> to vector<16x32xf32>
    %95 = arith.addf %93, %94 : vector<16x32xf32>
    %96 = vector.extract_strided_slice %92 {offsets = [32, 0], sizes = [16, 32], strides = [1, 1]} : vector<64x32xf32> to vector<16x32xf32>
    %97 = arith.addf %95, %96 : vector<16x32xf32>
    %98 = vector.extract_strided_slice %92 {offsets = [48, 0], sizes = [16, 32], strides = [1, 1]} : vector<64x32xf32> to vector<16x32xf32>
    %99 = arith.addf %97, %98 : vector<16x32xf32>
    %cst_38 = arith.constant dense<0.000000e+00> : vector<16x32xf32>
    %100 = tpu.matmul %99, %73, %cst_38 {dimension_numbers = #tpu.dot_dimension_numbers<[1], [0], [0], [1], [0, 0, 1, 1], [], []>} : vector<16x32xf32>, vector<32x32xf32>, vector<16x32xf32> -> vector<16x32xf32>
    %101 = vector.broadcast %14 : vector<1x32xf32> to vector<16x32xf32>
    %102 = arith.addf %100, %101 : vector<16x32xf32>
    %103 = arith.addf %102, %69 : vector<16x32xf32>
    %cst_39 = arith.constant dense<0.000000e+00> : vector<16xf32>
    %104 = vector.multi_reduction <add>, %103, %cst_39 [1] : vector<16x32xf32> to vector<16xf32>
    %105 = vector.shape_cast %104 : vector<16xf32> to vector<16x1xf32>
    %cst_40 = arith.constant 3.200000e+01 : f32
    %106 = vector.broadcast %cst_40 : f32 to vector<16x1xf32>
    %107 = arith.divf %105, %106 : vector<16x1xf32>
    %108 = vector.broadcast %107 : vector<16x1xf32> to vector<16x32xf32>
    %109 = arith.subf %103, %108 : vector<16x32xf32>
    %110 = arith.mulf %109, %109 : vector<16x32xf32>
    %cst_41 = arith.constant dense<0.000000e+00> : vector<16xf32>
    %111 = vector.multi_reduction <add>, %110, %cst_41 [1] : vector<16x32xf32> to vector<16xf32>
    %112 = vector.shape_cast %111 : vector<16xf32> to vector<16x1xf32>
    %cst_42 = arith.constant 3.200000e+01 : f32
    %113 = vector.broadcast %cst_42 : f32 to vector<16x1xf32>
    %114 = arith.divf %112, %113 : vector<16x1xf32>
    %cst_43 = arith.constant 9.99999974E-6 : f32
    %115 = vector.broadcast %cst_43 : f32 to vector<16x1xf32>
    %116 = arith.addf %114, %115 : vector<16x1xf32>
    %117 = math.rsqrt %116 : vector<16x1xf32>
    %118 = vector.broadcast %117 : vector<16x1xf32> to vector<16x32xf32>
    %119 = arith.mulf %109, %118 : vector<16x32xf32>
    %120 = vector.broadcast %8 : vector<1x32xf32> to vector<16x32xf32>
    %121 = arith.mulf %119, %120 : vector<16x32xf32>
    %122 = vector.broadcast %11 : vector<1x32xf32> to vector<16x32xf32>
    %123 = arith.addf %121, %122 : vector<16x32xf32>
    %c0_44 = arith.constant 0 : index
    %c0_45 = arith.constant 0 : index
    %124 = vector.load %arg3[%c0_44, %c0_45] : memref<33x128xf32, #tpu.memory_space<vmem>>, vector<32x128xf32>
    %c32_46 = arith.constant 32 : index
    %c0_47 = arith.constant 0 : index
    %125 = vector.load %arg3[%c32_46, %c0_47] : memref<33x128xf32, #tpu.memory_space<vmem>>, vector<1x128xf32>
    %cst_48 = arith.constant dense<0.000000e+00> : vector<16x128xf32>
    %126 = tpu.matmul %123, %124, %cst_48 {dimension_numbers = #tpu.dot_dimension_numbers<[1], [0], [0], [1], [0, 0, 1, 1], [], []>} : vector<16x32xf32>, vector<32x128xf32>, vector<16x128xf32> -> vector<16x128xf32>
    %127 = vector.broadcast %125 : vector<1x128xf32> to vector<16x128xf32>
    %128 = arith.addf %126, %127 : vector<16x128xf32>
    %cst_49 = arith.constant 0.000000e+00 : f32
    %129 = vector.broadcast %cst_49 : f32 to vector<16x128xf32>
    %130 = arith.maximumf %128, %129 : vector<16x128xf32>
    %c256 = arith.constant 256 : index
    %c0_50 = arith.constant 0 : index
    %131 = vector.load %arg2[%c256, %c0_50] : memref<457x32xf32, #tpu.memory_space<vmem>>, vector<128x32xf32>
    %cst_51 = arith.constant dense<0.000000e+00> : vector<16x32xf32>
    %132 = tpu.matmul %130, %131, %cst_51 {dimension_numbers = #tpu.dot_dimension_numbers<[1], [0], [0], [1], [0, 0, 1, 1], [], []>} : vector<16x128xf32>, vector<128x32xf32>, vector<16x32xf32> -> vector<16x32xf32>
    %133 = vector.broadcast %15 : vector<1x32xf32> to vector<16x32xf32>
    %134 = arith.addf %132, %133 : vector<16x32xf32>
    %135 = arith.addf %134, %123 : vector<16x32xf32>
    %cst_52 = arith.constant dense<0.000000e+00> : vector<16xf32>
    %136 = vector.multi_reduction <add>, %135, %cst_52 [1] : vector<16x32xf32> to vector<16xf32>
    %137 = vector.shape_cast %136 : vector<16xf32> to vector<16x1xf32>
    %cst_53 = arith.constant 3.200000e+01 : f32
    %138 = vector.broadcast %cst_53 : f32 to vector<16x1xf32>
    %139 = arith.divf %137, %138 : vector<16x1xf32>
    %140 = vector.broadcast %139 : vector<16x1xf32> to vector<16x32xf32>
    %141 = arith.subf %135, %140 : vector<16x32xf32>
    %142 = arith.mulf %141, %141 : vector<16x32xf32>
    %cst_54 = arith.constant dense<0.000000e+00> : vector<16xf32>
    %143 = vector.multi_reduction <add>, %142, %cst_54 [1] : vector<16x32xf32> to vector<16xf32>
    %144 = vector.shape_cast %143 : vector<16xf32> to vector<16x1xf32>
    %cst_55 = arith.constant 3.200000e+01 : f32
    %145 = vector.broadcast %cst_55 : f32 to vector<16x1xf32>
    %146 = arith.divf %144, %145 : vector<16x1xf32>
    %cst_56 = arith.constant 9.99999974E-6 : f32
    %147 = vector.broadcast %cst_56 : f32 to vector<16x1xf32>
    %148 = arith.addf %146, %147 : vector<16x1xf32>
    %149 = math.rsqrt %148 : vector<16x1xf32>
    %150 = vector.broadcast %149 : vector<16x1xf32> to vector<16x32xf32>
    %151 = arith.mulf %141, %150 : vector<16x32xf32>
    %152 = vector.broadcast %9 : vector<1x32xf32> to vector<16x32xf32>
    %153 = arith.mulf %151, %152 : vector<16x32xf32>
    %154 = vector.broadcast %12 : vector<1x32xf32> to vector<16x32xf32>
    %155 = arith.addf %153, %154 : vector<16x32xf32>
    %c0_57 = arith.constant 0 : index
    %c0_58 = arith.constant 0 : index
    %156 = vector.load %arg4[%c0_57, %c0_58] : memref<16x32xf32, #tpu.memory_space<vmem>>, vector<16x32xf32>
    tpu.vector_store %arg4[%c0_57, %c0_58], %155 {strides = array<i32>} : memref<16x32xf32, #tpu.memory_space<vmem>>, vector<16x32xf32>,
    return
  }
}

</mosaic_0001>

<llo_original>
// kernel: tile.15
$region0: #{tile.15}
  %s0 = inlined_call_operand.vmem [shape: f32[4,16,16], index: 0, kind: input, shape index: {}]
  %s1 = inlined_call_operand.vmem [shape: f32[64,16], index: 1, kind: output, shape index: {}]
  $region1: #{tile.15} parent=0
    #allocation0 [shape = 'u8[65536]{0}', space=vmem, size = 0x10000, scoped, tag = 'scoped mem for input reshape']
    %s3 = ssub.s32 16, 1
    %s4 = scalar_lea.vmem %s0, 60
    %v5 = vld [vmem:[%s4] sm:%s3]
    %s6 = scalar_lea.vmem [#allocation0], 120
    %7 = vst [vmem:[%s6] sm:%s3] %v5
    %s8 = scalar_lea.vmem %s0, 56
    %v9 = vld [vmem:[%s8] sm:%s3]
    %s10 = scalar_lea.vmem [#allocation0], 112
    %11 = vst [vmem:[%s10] sm:%s3] %v9
    %s12 = scalar_lea.vmem %s0, 52
    %v13 = vld [vmem:[%s12] sm:%s3]
    %s14 = scalar_lea.vmem [#allocation0], 104
    %15 = vst [vmem:[%s14] sm:%s3] %v13
    %s16 = scalar_lea.vmem %s0, 48
    %v17 = vld [vmem:[%s16] sm:%s3]
    %s18 = scalar_lea.vmem [#allocation0], 96
    %19 = vst [vmem:[%s18] sm:%s3] %v17
    %s20 = scalar_lea.vmem %s0, 44
    %v21 = vld [vmem:[%s20] sm:%s3]
    %s22 = scalar_lea.vmem [#allocation0], 88
    %23 = vst [vmem:[%s22] sm:%s3] %v21
    %s24 = scalar_lea.vmem %s0, 40
    %v25 = vld [vmem:[%s24] sm:%s3]
    %s26 = scalar_lea.vmem [#allocation0], 80
    %27 = vst [vmem:[%s26] sm:%s3] %v25
    %s28 = scalar_lea.vmem %s0, 36
    %v29 = vld [vmem:[%s28] sm:%s3]
    %s30 = scalar_lea.vmem [#allocation0], 72
    %31 = vst [vmem:[%s30] sm:%s3] %v29
    %s32 = scalar_lea.vmem %s0, 32
    %v33 = vld [vmem:[%s32] sm:%s3]
    %s34 = scalar_lea.vmem [#allocation0], 64
    %35 = vst [vmem:[%s34] sm:%s3] %v33
    %s36 = scalar_lea.vmem %s0, 28
    %v37 = vld [vmem:[%s36] sm:%s3]
    %s38 = scalar_lea.vmem [#allocation0], 56
    %39 = vst [vmem:[%s38] sm:%s3] %v37
    %s40 = scalar_lea.vmem %s0, 24
    %v41 = vld [vmem:[%s40] sm:%s3]
    %s42 = scalar_lea.vmem [#allocation0], 48
    %43 = vst [vmem:[%s42] sm:%s3] %v41
    %s44 = scalar_lea.vmem %s0, 20
    %v45 = vld [vmem:[%s44] sm:%s3]
    %s46 = scalar_lea.vmem [#allocation0], 40
    %47 = vst [vmem:[%s46] sm:%s3] %v45
    %s48 = scalar_lea.vmem %s0, 16
    %v49 = vld [vmem:[%s48] sm:%s3]
    %s50 = scalar_lea.vmem [#allocation0], 32
    %51 = vst [vmem:[%s50] sm:%s3] %v49
    %s52 = scalar_lea.vmem %s0, 12
    %v53 = vld [vmem:[%s52] sm:%s3]
    %s54 = scalar_lea.vmem [#allocation0], 24
    %55 = vst [vmem:[%s54] sm:%s3] %v53
    %s56 = scalar_lea.vmem %s0, 8
    %v57 = vld [vmem:[%s56] sm:%s3]
    %s58 = scalar_lea.vmem [#allocation0], 16
    %59 = vst [vmem:[%s58] sm:%s3] %v57
    %s60 = scalar_lea.vmem %s0, 4
    %v61 = vld [vmem:[%s60] sm:%s3]
    %s62 = scalar_lea.vmem [#allocation0], 8
    %63 = vst [vmem:[%s62] sm:%s3] %v61
    %v64 = vld [vmem:[%s0] sm:%s3]
    %65 = vst [vmem:[#allocation0] sm:%s3] %v64
    %v66 = vld [vmem:[#allocation0] ss:$8 sm:$0xf]
    %v67 = vld [vmem:[#allocation0] ss:$8 sm:$0xf0]
    %vm68 = vcmask 1047556
    %v69 = vsel %vm68, %v67, %v66
    %vm70 = vcmask 130048
    %71 = vst.msk [vmem:[%s1] sm:$0xff] %vm70, %v69
    %s72 = scalar_lea.vmem [#allocation0], 64
    %v73 = vld [vmem:[%s72] ss:$8 sm:$0xf]
    %s74 = scalar_lea.vmem [#allocation0], 64
    %v75 = vld [vmem:[%s74] ss:$8 sm:$0xf0]
    %vm76 = vcmask 1047556
    %v77 = vsel %vm76, %v75, %v73
    %vm78 = vcmask 130048
    %s79 = scalar_lea.vmem %s1, 8
    %80 = vst.msk [vmem:[%s79] sm:$0xff] %vm78, %v77
    %s81 = scalar_lea.vmem [#allocation0], 3
    %v82 = vld [vmem:[%s81] ss:$8 sm:$0xf]
    %s83 = scalar_lea.vmem [#allocation0], 3
    %v84 = vld [vmem:[%s83] ss:$8 sm:$0xf0]
    %vm85 = vcmask 1047556
    %v86 = vsel %vm85, %v84, %v82
    %87 = vrot.lane.b32.xlu0 %v86, 48
    %v88 = vpop.permute.xlu0 %87
    %vm89 = vcmask 523648
    %90 = vst.msk [vmem:[%s1] sm:$0xff] %vm89, %v88
    %s91 = scalar_lea.vmem [#allocation0], 67
    %v92 = vld [vmem:[%s91] ss:$8 sm:$0xf]
    %s93 = scalar_lea.vmem [#allocation0], 67
    %v94 = vld [vmem:[%s93] ss:$8 sm:$0xf0]
    %vm95 = vcmask 1047556
    %v96 = vsel %vm95, %v94, %v92
    %97 = vrot.lane.b32.xlu0 %v96, 48
    %v98 = vpop.permute.xlu0 %97
    %vm99 = vcmask 523648
    %s100 = scalar_lea.vmem %s1, 8
    %101 = vst.msk [vmem:[%s100] sm:$0xff] %vm99, %v98
    %s102 = scalar_lea.vmem [#allocation0], 2
    %v103 = vld [vmem:[%s102] ss:$8 sm:$0xf]
    %s104 = scalar_lea.vmem [#allocation0], 2
    %v105 = vld [vmem:[%s104] ss:$8 sm:$0xf0]
    %vm106 = vcmask 1047556
    %v107 = vsel %vm106, %v105, %v103
    %108 = vrot.lane.b32.xlu0 %v107, 32
    %v109 = vpop.permute.xlu0 %108
    %vm110 = vcmask 392448
    %111 = vst.msk [vmem:[%s1] sm:$0xff] %vm110, %v109
    %s112 = scalar_lea.vmem [#allocation0], 66
    %v113 = vld [vmem:[%s112] ss:$8 sm:$0xf]
    %s114 = scalar_lea.vmem [#allocation0], 66
    %v115 = vld [vmem:[%s114] ss:$8 sm:$0xf0]
    %vm116 = vcmask 1047556
    %v117 = vsel %vm116, %v115, %v113
    %118 = vrot.lane.b32.xlu0 %v117, 32
    %v119 = vpop.permute.xlu0 %118
    %vm120 = vcmask 392448
    %s121 = scalar_lea.vmem %s1, 8
    %122 = vst.msk [vmem:[%s121] sm:$0xff] %vm120, %v119
    %s123 = scalar_lea.vmem [#allocation0], 1
    %v124 = vld [vmem:[%s123] ss:$8 sm:$0xf]
    %s125 = scalar_lea.vmem [#allocation0], 1
    %v126 = vld [vmem:[%s125] ss:$8 sm:$0xf0]
    %vm127 = vcmask 1047556
    %v128 = vsel %vm127, %v126, %v124
    %129 = vrot.lane.b32.xlu0 %v128, 16
    %v130 = vpop.permute.xlu0 %129
    %vm131 = vcmask 261248
    %132 = vst.msk [vmem:[%s1] sm:$0xff] %vm131, %v130
    %s133 = scalar_lea.vmem [#allocation0], 65
    %v134 = vld [vmem:[%s133] ss:$8 sm:$0xf]
    %s135 = scalar_lea.vmem [#allocation0], 65
    %v136 = vld [vmem:[%s135] ss:$8 sm:$0xf0]
    %vm137 = vcmask 1047556
    %v138 = vsel %vm137, %v136, %v134
    %139 = vrot.lane.b32.xlu0 %v138, 16
    %v140 = vpop.permute.xlu0 %139
    %vm141 = vcmask 261248
    %s142 = scalar_lea.vmem %s1, 8
    %143 = vst.msk [vmem:[%s142] sm:$0xff] %vm141, %v140

// kernel: decoder_block_pallas.1
$region0: #{decoder_block_pallas.1}
  #allocation0 [shape = 'u32[]', space=smem, size = 0x4, offset = 0x4, fixed_abs, tag = 'smem constant byte address 0x4 - core index']
  #allocation1 [shape = 'u32[72,128]{1,0:T(1,128)}', space=vmem, size = 0x9000, scoped, tag = 'internal scratch']
  %s0 = inlined_call_operand.vmem [shape: f32[48,32], index: 0, kind: input, shape index: {}]
  %s1 = inlined_call_operand.vmem [shape: f32[128,16], index: 1, kind: input, shape index: {}]
  %s2 = inlined_call_operand.vmem [shape: f32[457,32], index: 2, kind: input, shape index: {}]
  %s3 = inlined_call_operand.vmem [shape: f32[33,128], index: 3, kind: input, shape index: {}]
  %s4 = inlined_call_operand.hbm [shape: f32[16,32], index: 4, kind: output, shape index: {}]
  %s5 = sld [smem:[#allocation0]]
  $region26: #{decoder_block_pallas.1} parent=0
    _
  %s7 = ssub.s32 1, %s5
  %s8 = scalar_select 0, %s7, %s5
  $region1: #{decoder_block_pallas.1} parent=0
    #allocation2 [shape = 'u8[8192]{0}', space=vmem, size = 0x2000, scoped, tag = 'output window, operand 0, single buffered']
    #allocation3 [shape = 's32[1]{0}', space=sflag, size = 0x4, scoped, tag = 'scoped memory for decoder_block_pallas.1']
    %9 = vsyncpa [#allocation3], 0
    // Predicated region
    $region2: #{decoder_block_pallas.1} parent=1 // pred_check
      _
    $region3: #{decoder_block_pallas.1} parent=1 // pred_check_branch
      %11 = sbr.rel (0) target = $region5
    $region4: #{decoder_block_pallas.1} parent=1 // pred_region
      _
    $region5: #{decoder_block_pallas.1} parent=1 // pred_fallthru
      _
    // Predicated region
    $region6: #{decoder_block_pallas.1} parent=1 // pred_check
      _
    $region7: #{decoder_block_pallas.1} parent=1 // pred_check_branch
      %13 = sbr.rel (0) target = $region9
    $region8: #{decoder_block_pallas.1} parent=1 // pred_region
      _
    $region9: #{decoder_block_pallas.1} parent=1 // pred_fallthru
      _
    // Predicated region
    $region10: #{decoder_block_pallas.1} parent=1 // pred_check
      _
    $region11: #{decoder_block_pallas.1} parent=1 // pred_check_branch
      %15 = sbr.rel (0) target = $region13
    $region12: #{decoder_block_pallas.1} parent=1 // pred_region
      _
    $region13: #{decoder_block_pallas.1} parent=1 // pred_fallthru
      _
    // Predicated region
    $region14: #{decoder_block_pallas.1} parent=1 // pred_check
      _
    $region15: #{decoder_block_pallas.1} parent=1 // pred_check_branch
      %17 = sbr.rel (0) target = $region17
    $region16: #{decoder_block_pallas.1} parent=1 // pred_region
      _
    $region17: #{decoder_block_pallas.1} parent=1 // pred_fallthru
      _
    %v18 = vld [vmem:[%s0] sm:$0xff]
    %v19 = vld [vmem:[%s0 + $0x8] sm:$0xff]
    %v20 = vld [vmem:[%s0 + $0x10] sm:$0xff]
    %v21 = vld [vmem:[%s0 + $0x18] sm:$0xff]
    %v22 = vld [vmem:[%s0 + $0x20] sm:$0xff]
    %v23 = vld [vmem:[%s0 + $0x28] sm:$0xff]
    %v24 = vld [vmem:[%s1] sm:$0xff]
    %v25 = vld [vmem:[%s1 + $0x8] sm:$0xff]
    %v26 = vld [vmem:[%s1 + $0x10] sm:$0xff]
    %v27 = vld [vmem:[%s1 + $0x18] sm:$0xff]
    %v28 = vld [vmem:[%s1 + $0x20] sm:$0xff]
    %v29 = vld [vmem:[%s1 + $0x28] sm:$0xff]
    %v30 = vld [vmem:[%s1 + $0x30] sm:$0xff]
    %v31 = vld [vmem:[%s1 + $0x38] sm:$0xff]
    %v32 = vld [vmem:[%s1 + $0x40] sm:$0xff]
    %v33 = vld [vmem:[%s1 + $0x48] sm:$0xff]
    %v34 = vld [vmem:[%s1 + $0x50] sm:$0xff]
    %v35 = vld [vmem:[%s1 + $0x58] sm:$0xff]
    %v36 = vld [vmem:[%s1 + $0x60] sm:$0xff]
    %v37 = vld [vmem:[%s1 + $0x68] sm:$0xff]
    %v38 = vld [vmem:[%s1 + $0x70] sm:$0xff]
    %v39 = vld [vmem:[%s1 + $0x78] sm:$0xff]
    %v40 = vld [vmem:[%s2 + $0x180] sm:$0xff]
    %v41 = vld [vmem:[%s2 + $0x188] sm:$0xff]
    %v42 = vld [vmem:[%s2 + $0x190] sm:$0xff]
    %v43 = vld [vmem:[%s2 + $0x198] sm:$0xff]
    %v44 = vld [vmem:[%s2 + $0x1a0] sm:$0xff]
    %v45 = vld [vmem:[%s2 + $0x1a8] sm:$0xff]
    %v46 = vld [vmem:[%s2 + $0x1b0] sm:$0xff]
    %v47 = vld [vmem:[%s2 + $0x1b8] sm:$0xff]
    %v48 = vld [vmem:[%s2 + $0x1c0] sm:$0xff]
    %v49 = vld [vmem:[%s2 + $0x1c8] sm:$0x1]
    %v50 = vld [vmem:[%s2] sm:$0xff]
    %v51 = vld [vmem:[%s2 + $0x8] sm:$0xff]
    %v52 = vld [vmem:[%s2 + $0x10] sm:$0xff]
    %v53 = vld [vmem:[%s2 + $0x18] sm:$0xff]
    %v54 = vld [vmem:[%s2 + $0x20] sm:$0xff]
    %v55 = vld [vmem:[%s2 + $0x28] sm:$0xff]
    %v56 = vld [vmem:[%s2 + $0x30] sm:$0xff]
    %v57 = vld [vmem:[%s2 + $0x38] sm:$0xff]
    %v58 = vld [vmem:[%s2 + $0x40] sm:$0xff]
    %v59 = vld [vmem:[%s2 + $0x48] sm:$0xff]
    %v60 = vld [vmem:[%s2 + $0x50] sm:$0xff]
    %v61 = vld [vmem:[%s2 + $0x58] sm:$0xff]
    %v62 = vld [vmem:[%s2 + $0x60] sm:$0xff]
    %v63 = vld [vmem:[%s2 + $0x68] sm:$0xff]
    %v64 = vld [vmem:[%s2 + $0x70] sm:$0xff]
    %v65 = vld [vmem:[%s2 + $0x78] sm:$0xff]
    %vm66 = vcmask 261120
    %v68 = vsel %vm66, %v18, 0
    %v71 = vsel %vm66, %v19, 0
    %73 = vmatpush.msra.mxu0 0.0
    %74 = vmatpush.msra.mxu0 0.0
    %75 = vmatpush.msra.mxu0 0.0
    %76 = vmatpush.msra.mxu0 0.0
    %77 = vmatpush.msra.mxu0 0.0
    %78 = vmatpush.msra.mxu0 0.0
    %79 = vmatpush.msra.mxu0 0.0
    %80 = vmatpush.msra.mxu0 0.0
    %81 = vmatpush.msra.mxu0 0.0
    %82 = vmatpush.msra.mxu0 0.0
    %83 = vmatpush.msra.mxu0 0.0
    %84 = vmatpush.msra.mxu0 0.0
    %85 = vmatpush.msra.mxu0 %v53
    %86 = vmatpush.msra.mxu0 %v52
    %87 = vmatpush.msra.mxu0 %v51
    %88 = vmatpush.msra.mxu0 %v50
    %89 = vmatmul.f32.gmra.mxu0 %v68
    %v90 = vpop.f32.mrf.mxu0
    %v91 = vadd.f32 0.0, %v90
    %92 = vmatmul.f32.gmra.mxu0 %v71
    %v93 = vpop.f32.mrf.mxu0
    %v94 = vadd.f32 0.0, %v93
    %95 = vdwg.mxu0
    %96 = vmatpush.msra.mxu0 0.0
    %97 = vmatpush.msra.mxu0 0.0
    %98 = vmatpush.msra.mxu0 0.0
    %99 = vmatpush.msra.mxu0 0.0
    %100 = vmatpush.msra.mxu0 0.0
    %101 = vmatpush.msra.mxu0 0.0
    %102 = vmatpush.msra.mxu0 0.0
    %103 = vmatpush.msra.mxu0 0.0
    %104 = vmatpush.msra.mxu0 0.0
    %105 = vmatpush.msra.mxu0 0.0
    %106 = vmatpush.msra.mxu0 0.0
    %107 = vmatpush.msra.mxu0 0.0
    %108 = vmatpush.msra.mxu0 %v57
    %109 = vmatpush.msra.mxu0 %v56
    %110 = vmatpush.msra.mxu0 %v55
    %111 = vmatpush.msra.mxu0 %v54
    %112 = vmatmul.f32.gmra.mxu0 %v68
    %v113 = vpop.f32.mrf.mxu0
    %v114 = vadd.f32 0.0, %v113
    %115 = vmatmul.f32.gmra.mxu0 %v71
    %v116 = vpop.f32.mrf.mxu0
    %v117 = vadd.f32 0.0, %v116
    %118 = vdwg.mxu0
    %119 = vmatpush.msra.mxu0 0.0
    %120 = vmatpush.msra.mxu0 0.0
    %121 = vmatpush.msra.mxu0 0.0
    %122 = vmatpush.msra.mxu0 0.0
    %123 = vmatpush.msra.mxu0 0.0
    %124 = vmatpush.msra.mxu0 0.0
    %125 = vmatpush.msra.mxu0 0.0
    %126 = vmatpush.msra.mxu0 0.0
    %127 = vmatpush.msra.mxu0 0.0
    %128 = vmatpush.msra.mxu0 0.0
    %129 = vmatpush.msra.mxu0 0.0
    %130 = vmatpush.msra.mxu0 0.0
    %131 = vmatpush.msra.mxu0 %v61
    %132 = vmatpush.msra.mxu0 %v60
    %133 = vmatpush.msra.mxu0 %v59
    %134 = vmatpush.msra.mxu0 %v58
    %135 = vmatmul.f32.gmra.mxu0 %v68
    %v136 = vpop.f32.mrf.mxu0
    %v137 = vadd.f32 0.0, %v136
    %138 = vmatmul.f32.gmra.mxu0 %v71
    %v139 = vpop.f32.mrf.mxu0
    %v140 = vadd.f32 0.0, %v139
    %141 = vdwg.mxu0
    %v142 = vmul.f32 %v91, %v40
    %v143 = vmul.f32 %v94, %v41
    %v144 = vmul.f32 %v91, %v42
    %v145 = vmul.f32 %v94, %v43
    %v146 = vmul.f32 %v91, %v44
    %v147 = vmul.f32 %v94, %v45
    %v148 = vmul.f32 %v91, %v46
    %v149 = vmul.f32 %v94, %v47
    %v151 = vsel %vm66, %v142, 0
    %v154 = vsel %vm66, %v143, 0
    %v157 = vsel %vm66, %v144, 0
    %v160 = vsel %vm66, %v145, 0
    %v163 = vsel %vm66, %v146, 0
    %v166 = vsel %vm66, %v147, 0
    %v169 = vsel %vm66, %v148, 0
    %v172 = vsel %vm66, %v149, 0
    %v175 = vsel %vm66, %v114, 0
    %v178 = vsel %vm66, %v117, 0
    %180 = vmatpush.xpose.msra.mxu0 0.0
    %181 = vmatpush.xpose.msra.mxu0 0.0
    %182 = vmatpush.xpose.msra.mxu0 0.0
    %183 = vmatpush.xpose.msra.mxu0 0.0
    %184 = vmatpush.xpose.msra.mxu0 0.0
    %185 = vmatpush.xpose.msra.mxu0 0.0
    %186 = vmatpush.xpose.msra.mxu0 0.0
    %187 = vmatpush.xpose.msra.mxu0 0.0
    %188 = vmatpush.xpose.msra.mxu0 0.0
    %189 = vmatpush.xpose.msra.mxu0 0.0
    %190 = vmatpush.xpose.msra.mxu0 0.0
    %191 = vmatpush.xpose.msra.mxu0 0.0
    %192 = vmatpush.xpose.msra.mxu0 0.0
    %193 = vmatpush.xpose.msra.mxu0 0.0
    %194 = vmatpush.xpose.msra.mxu0 %v178
    %195 = vmatpush.xpose.msra.mxu0 %v175
    %196 = vmatmul.f32.gmra.mxu0 %v151
    %v197 = vpop.f32.mrf.mxu0
    %v198 = vadd.f32 %v24, %v197
    %199 = vmatmul.f32.gmra.mxu0 %v154
    %v200 = vpop.f32.mrf.mxu0
    %v201 = vadd.f32 %v25, %v200
    %202 = vmatmul.f32.gmra.mxu0 %v157
    %v203 = vpop.f32.mrf.mxu0
    %v204 = vadd.f32 %v26, %v203
    %205 = vmatmul.f32.gmra.mxu0 %v160
    %v206 = vpop.f32.mrf.mxu0
    %v207 = vadd.f32 %v27, %v206
    %208 = vmatmul.f32.gmra.mxu0 %v163
    %v209 = vpop.f32.mrf.mxu0
    %v210 = vadd.f32 %v28, %v209
    %211 = vmatmul.f32.gmra.mxu0 %v166
    %v212 = vpop.f32.mrf.mxu0
    %v213 = vadd.f32 %v29, %v212
    %214 = vmatmul.f32.gmra.mxu0 %v169
    %v215 = vpop.f32.mrf.mxu0
    %v216 = vadd.f32 %v30, %v215
    %217 = vmatmul.f32.gmra.mxu0 %v172
    %v218 = vpop.f32.mrf.mxu0
    %v219 = vadd.f32 %v31, %v218
    %220 = vdwg.mxu0
    %vm221 = vcmask 130048
    %v222 = vsel %vm221, %v198, -inf
    %223 = vmax.xlane.f32.xlu0 %v222
    %v224 = vpop.xlane.xlu0 %223
    %v225 = vsel %vm221, %v201, -inf
    %226 = vmax.xlane.f32.xlu0 %v225
    %v227 = vpop.xlane.xlu0 %226
    %v228 = vsel %vm221, %v204, -inf
    %229 = vmax.xlane.f32.xlu0 %v228
    %v230 = vpop.xlane.xlu0 %229
    %v231 = vsel %vm221, %v207, -inf
    %232 = vmax.xlane.f32.xlu0 %v231
    %v233 = vpop.xlane.xlu0 %232
    %v234 = vsel %vm221, %v210, -inf
    %235 = vmax.xlane.f32.xlu0 %v234
    %v236 = vpop.xlane.xlu0 %235
    %v237 = vsel %vm221, %v213, -inf
    %238 = vmax.xlane.f32.xlu0 %v237
    %v239 = vpop.xlane.xlu0 %238
    %v240 = vsel %vm221, %v216, -inf
    %241 = vmax.xlane.f32.xlu0 %v240
    %v242 = vpop.xlane.xlu0 %241
    %v243 = vsel %vm221, %v219, -inf
    %244 = vmax.xlane.f32.xlu0 %v243
    %v245 = vpop.xlane.xlu0 %244
    %v246 = vsub.f32 %v198, %v224
    %v247 = vsub.f32 %v201, %v227
    %v248 = vsub.f32 %v204, %v230
    %v249 = vsub.f32 %v207, %v233
    %v250 = vsub.f32 %v210, %v236
    %v251 = vsub.f32 %v213, %v239
    %v252 = vsub.f32 %v216, %v242
    %v253 = vsub.f32 %v219, %v245
    %v254 = vmul.f32 %v246, 1.442695
    %v255 = vpow.pop %v254
    %v256 = vmul.f32 %v247, 1.442695
    %v257 = vpow.pop %v256
    %v258 = vmul.f32 %v248, 1.442695
    %v259 = vpow.pop %v258
    %v260 = vmul.f32 %v249, 1.442695
    %v261 = vpow.pop %v260
    %v262 = vmul.f32 %v250, 1.442695
    %v263 = vpow.pop %v262
    %v264 = vmul.f32 %v251, 1.442695
    %v265 = vpow.pop %v264
    %v266 = vmul.f32 %v252, 1.442695
    %v267 = vpow.pop %v266
    %v268 = vmul.f32 %v253, 1.442695
    %v269 = vpow.pop %v268
    %v270 = vsel %vm221, %v255, 0.0
    %271 = vadd.xlane.f32.xlu0 %v270
    %v272 = vpop.xlane.xlu0 %271
    %v273 = vsel %vm221, %v257, 0.0
    %274 = vadd.xlane.f32.xlu0 %v273
    %v275 = vpop.xlane.xlu0 %274
    %v276 = vsel %vm221, %v259, 0.0
    %277 = vadd.xlane.f32.xlu0 %v276
    %v278 = vpop.xlane.xlu0 %277
    %v279 = vsel %vm221, %v261, 0.0
    %280 = vadd.xlane.f32.xlu0 %v279
    %v281 = vpop.xlane.xlu0 %280
    %v282 = vsel %vm221, %v263, 0.0
    %283 = vadd.xlane.f32.xlu0 %v282
    %v284 = vpop.xlane.xlu0 %283
    %v285 = vsel %vm221, %v265, 0.0
    %286 = vadd.xlane.f32.xlu0 %v285
    %v287 = vpop.xlane.xlu0 %286
    %v288 = vsel %vm221, %v267, 0.0
    %289 = vadd.xlane.f32.xlu0 %v288
    %v290 = vpop.xlane.xlu0 %289
    %v291 = vsel %vm221, %v269, 0.0
    %292 = vadd.xlane.f32.xlu0 %v291
    %v293 = vpop.xlane.xlu0 %292
    %v294 = vrcp.pop %v272
    %v295 = vrcp.pop %v275
    %v296 = vrcp.pop %v278
    %v297 = vrcp.pop %v281
    %v298 = vrcp.pop %v284
    %v299 = vrcp.pop %v287
    %v300 = vrcp.pop %v290
    %v301 = vrcp.pop %v293
    %v302 = vmul.f32 %v255, %v294
    %v303 = vmul.f32 %v257, %v295
    %v304 = vmul.f32 %v259, %v296
    %v305 = vmul.f32 %v261, %v297
    %v306 = vmul.f32 %v263, %v298
    %v307 = vmul.f32 %v265, %v299
    %v308 = vmul.f32 %v267, %v300
    %v309 = vmul.f32 %v269, %v301
    %v311 = vsel %vm221, %v302, 0
    %v314 = vsel %vm221, %v303, 0
    %v317 = vsel %vm221, %v304, 0
    %v320 = vsel %vm221, %v305, 0
    %v323 = vsel %vm221, %v306, 0
    %v326 = vsel %vm221, %v307, 0
    %v329 = vsel %vm221, %v308, 0
    %v332 = vsel %vm221, %v309, 0
    %334 = vmatpush.msra.mxu0 0.0
    %335 = vmatpush.msra.mxu0 0.0
    %336 = vmatpush.msra.mxu0 0.0
    %337 = vmatpush.msra.mxu0 0.0
    %338 = vmatpush.msra.mxu0 0.0
    %339 = vmatpush.msra.mxu0 0.0
    %340 = vmatpush.msra.mxu0 0.0
    %341 = vmatpush.msra.mxu0 0.0
    %342 = vmatpush.msra.mxu0 0.0
    %343 = vmatpush.msra.mxu0 0.0
    %344 = vmatpush.msra.mxu0 0.0
    %345 = vmatpush.msra.mxu0 0.0
    %346 = vmatpush.msra.mxu0 0.0
    %347 = vmatpush.msra.mxu0 0.0
    %348 = vmatpush.msra.mxu0 %v140
    %349 = vmatpush.msra.mxu0 %v137
    %350 = vmatmul.f32.gmra.mxu0 %v311
    %v351 = vpop.f32.mrf.mxu0
    %v352 = vadd.f32 0.0, %v351
    %353 = vmatmul.f32.gmra.mxu0 %v314
    %v354 = vpop.f32.mrf.mxu0
    %v355 = vadd.f32 0.0, %v354
    %356 = vmatmul.f32.gmra.mxu0 %v317
    %v357 = vpop.f32.mrf.mxu0
    %v358 = vadd.f32 0.0, %v357
    %359 = vmatmul.f32.gmra.mxu0 %v320
    %v360 = vpop.f32.mrf.mxu0
    %v361 = vadd.f32 0.0, %v360
    %362 = vmatmul.f32.gmra.mxu0 %v323
    %v363 = vpop.f32.mrf.mxu0
    %v364 = vadd.f32 0.0, %v363
    %365 = vmatmul.f32.gmra.mxu0 %v326
    %v366 = vpop.f32.mrf.mxu0
    %v367 = vadd.f32 0.0, %v366
    %368 = vmatmul.f32.gmra.mxu0 %v329
    %v369 = vpop.f32.mrf.mxu0
    %v370 = vadd.f32 0.0, %v369
    %371 = vmatmul.f32.gmra.mxu0 %v332
    %v372 = vpop.f32.mrf.mxu0
    %v373 = vadd.f32 0.0, %v372
    %374 = vdwg.mxu0
    %v375 = vmul.f32 %v352, %v40
    %v376 = vmul.f32 %v355, %v41
    %v377 = vmul.f32 %v358, %v42
    %v378 = vmul.f32 %v361, %v43
    %v379 = vmul.f32 %v364, %v44
    %v380 = vmul.f32 %v367, %v45
    %v381 = vmul.f32 %v370, %v46
    %v382 = vmul.f32 %v373, %v47
    %v383 = vadd.f32 %v375, %v377
    %v384 = vadd.f32 %v376, %v378
    %v385 = vadd.f32 %v383, %v379
    %v386 = vadd.f32 %v384, %v380
    %v387 = vadd.f32 %v385, %v381
    %v388 = vadd.f32 %v386, %v382
    %v389 = vperm.slane %v48, 6
    %v391 = vsel %vm66, %v387, 0
    %v394 = vsel %vm66, %v388, 0
    %396 = vmatpush.msra.mxu0 0.0
    %397 = vmatpush.msra.mxu0 0.0
    %398 = vmatpush.msra.mxu0 0.0
    %399 = vmatpush.msra.mxu0 0.0
    %400 = vmatpush.msra.mxu0 0.0
    %401 = vmatpush.msra.mxu0 0.0
    %402 = vmatpush.msra.mxu0 0.0
    %403 = vmatpush.msra.mxu0 0.0
    %404 = vmatpush.msra.mxu0 0.0
    %405 = vmatpush.msra.mxu0 0.0
    %406 = vmatpush.msra.mxu0 0.0
    %407 = vmatpush.msra.mxu0 0.0
    %408 = vmatpush.msra.mxu0 %v65
    %409 = vmatpush.msra.mxu0 %v64
    %410 = vmatpush.msra.mxu0 %v63
    %411 = vmatpush.msra.mxu0 %v62
    %412 = vmatmul.f32.gmra.mxu0 %v391
    %v413 = vpop.f32.mrf.mxu0
    %v414 = vadd.f32 %v389, %v413
    %415 = vmatmul.f32.gmra.mxu0 %v394
    %v416 = vpop.f32.mrf.mxu0
    %v417 = vadd.f32 %v389, %v416
    %418 = vdwg.mxu0
    %v419 = vadd.f32 %v414, %v18
    %v420 = vadd.f32 %v417, %v19
    %v421 = vsel %vm66, %v419, 0.0
    %422 = vadd.xlane.f32.xlu0 %v421
    %v423 = vpop.xlane.xlu0 %422
    %v424 = vsel %vm66, %v420, 0.0
    %425 = vadd.xlane.f32.xlu0 %v424
    %v426 = vpop.xlane.xlu0 %425
    %v427 = vrcp.pop 32.0
    %v428 = vmul.f32 32.0, %v427
    %v429 = vsub.f32 1.0, %v428
    %v430 = vmul.f32 %v427, %v429
    %v431 = vadd.f32 %v427, %v430
    %vm432 = vweird.f32 %v427
    %v433 = vsel %vm432, %v427, %v431
    %v434 = vmul.f32 %v423, %v433
    %v435 = vmul.f32 %v426, %v433
    %v436 = vsub.f32 %v419, %v434
    %v437 = vsub.f32 %v420, %v435
    %v438 = vmul.f32 %v436, %v436
    %v439 = vmul.f32 %v437, %v437
    %v440 = vsel %vm66, %v438, 0.0
    %441 = vadd.xlane.f32.xlu0 %v440
    %v442 = vpop.xlane.xlu0 %441
    %v443 = vsel %vm66, %v439, 0.0
    %444 = vadd.xlane.f32.xlu0 %v443
    %v445 = vpop.xlane.xlu0 %444
    %v446 = vmul.f32 %v442, %v433
    %v447 = vmul.f32 %v445, %v433
    %v448 = vadd.f32 %v446, 1e-05
    %v449 = vadd.f32 %v447, 1e-05
    %v450 = vrsqrt.pop %v448
    %v451 = vmul.f32 %v450, %v448
    %v452 = vmul.f32 %v451, %v450
    %v453 = vmul.f32 0.5, %v452
    %v454 = vsub.f32 1.5, %v453
    %v455 = vmul.f32 %v450, %v454
    %vm456 = vweird.f32 %v448
    %vm457 = vweird.f32 %v450
    %vm458 = vmor %vm456, %vm457
    %v459 = vsel %vm458, %v450, %v455
    %v460 = vrsqrt.pop %v449
    %v461 = vmul.f32 %v460, %v449
    %v462 = vmul.f32 %v461, %v460
    %v463 = vmul.f32 0.5, %v462
    %v464 = vsub.f32 1.5, %v463
    %v465 = vmul.f32 %v460, %v464
    %vm466 = vweird.f32 %v449
    %vm467 = vweird.f32 %v460
    %vm468 = vmor %vm466, %vm467
    %v469 = vsel %vm468, %v460, %v465
    %v470 = vmul.f32 %v436, %v459
    %v471 = vmul.f32 %v437, %v469
    %v472 = vperm.slane %v48, 0
    %v473 = vmul.f32 %v470, %v472
    %v474 = vmul.f32 %v471, %v472
    %v475 = vperm.slane %v48, 1
    %v476 = vadd.f32 %v473, %v475
    %v477 = vadd.f32 %v474, %v475
    %v478 = vld [vmem:[%s2 + $0x80] sm:$0xff]
    %v479 = vld [vmem:[%s2 + $0x88] sm:$0xff]
    %v480 = vld [vmem:[%s2 + $0x90] sm:$0xff]
    %v481 = vld [vmem:[%s2 + $0x98] sm:$0xff]
    %v482 = vld [vmem:[%s2 + $0xa0] sm:$0xff]
    %v483 = vld [vmem:[%s2 + $0xa8] sm:$0xff]
    %v484 = vld [vmem:[%s2 + $0xb0] sm:$0xff]
    %v485 = vld [vmem:[%s2 + $0xb8] sm:$0xff]
    %v486 = vld [vmem:[%s2 + $0xc0] sm:$0xff]
    %v487 = vld [vmem:[%s2 + $0xc8] sm:$0xff]
    %v488 = vld [vmem:[%s2 + $0xd0] sm:$0xff]
    %v489 = vld [vmem:[%s2 + $0xd8] sm:$0xff]
    %v490 = vld [vmem:[%s2 + $0xe0] sm:$0xff]
    %v491 = vld [vmem:[%s2 + $0xe8] sm:$0xff]
    %v492 = vld [vmem:[%s2 + $0xf0] sm:$0xff]
    %v493 = vld [vmem:[%s2 + $0xf8] sm:$0xff]
    %v495 = vsel %vm66, %v476, 0
    %v498 = vsel %vm66, %v477, 0
    %500 = vmatpush.msra.mxu0 0.0
    %501 = vmatpush.msra.mxu0 0.0
    %502 = vmatpush.msra.mxu0 0.0
    %503 = vmatpush.msra.mxu0 0.0
    %504 = vmatpush.msra.mxu0 0.0
    %505 = vmatpush.msra.mxu0 0.0
    %506 = vmatpush.msra.mxu0 0.0
    %507 = vmatpush.msra.mxu0 0.0
    %508 = vmatpush.msra.mxu0 0.0
    %509 = vmatpush.msra.mxu0 0.0
    %510 = vmatpush.msra.mxu0 0.0
    %511 = vmatpush.msra.mxu0 0.0
    %512 = vmatpush.msra.mxu0 %v481
    %513 = vmatpush.msra.mxu0 %v480
    %514 = vmatpush.msra.mxu0 %v479
    %515 = vmatpush.msra.mxu0 %v478
    %516 = vmatmul.f32.gmra.mxu0 %v495
    %v517 = vpop.f32.mrf.mxu0
    %v518 = vadd.f32 0.0, %v517
    %519 = vmatmul.f32.gmra.mxu0 %v498
    %v520 = vpop.f32.mrf.mxu0
    %v521 = vadd.f32 0.0, %v520
    %522 = vdwg.mxu0
    %v524 = vsel %vm66, %v22, 0
    %v527 = vsel %vm66, %v23, 0
    %529 = vmatpush.msra.mxu0 0.0
    %530 = vmatpush.msra.mxu0 0.0
    %531 = vmatpush.msra.mxu0 0.0
    %532 = vmatpush.msra.mxu0 0.0
    %533 = vmatpush.msra.mxu0 0.0
    %534 = vmatpush.msra.mxu0 0.0
    %535 = vmatpush.msra.mxu0 0.0
    %536 = vmatpush.msra.mxu0 0.0
    %537 = vmatpush.msra.mxu0 0.0
    %538 = vmatpush.msra.mxu0 0.0
    %539 = vmatpush.msra.mxu0 0.0
    %540 = vmatpush.msra.mxu0 0.0
    %541 = vmatpush.msra.mxu0 %v485
    %542 = vmatpush.msra.mxu0 %v484
    %543 = vmatpush.msra.mxu0 %v483
    %544 = vmatpush.msra.mxu0 %v482
    %545 = vmatmul.f32.gmra.mxu0 %v524
    %v546 = vpop.f32.mrf.mxu0
    %v547 = vadd.f32 0.0, %v546
    %548 = vmatmul.f32.gmra.mxu0 %v527
    %v549 = vpop.f32.mrf.mxu0
    %v550 = vadd.f32 0.0, %v549
    %551 = vdwg.mxu0
    %v553 = vsel %vm66, %v20, 0
    %v556 = vsel %vm66, %v21, 0
    %558 = vmatpush.msra.mxu0 0.0
    %559 = vmatpush.msra.mxu0 0.0
    %560 = vmatpush.msra.mxu0 0.0
    %561 = vmatpush.msra.mxu0 0.0
    %562 = vmatpush.msra.mxu0 0.0
    %563 = vmatpush.msra.mxu0 0.0
    %564 = vmatpush.msra.mxu0 0.0
    %565 = vmatpush.msra.mxu0 0.0
    %566 = vmatpush.msra.mxu0 0.0
    %567 = vmatpush.msra.mxu0 0.0
    %568 = vmatpush.msra.mxu0 0.0
    %569 = vmatpush.msra.mxu0 0.0
    %570 = vmatpush.msra.mxu0 %v489
    %571 = vmatpush.msra.mxu0 %v488
    %572 = vmatpush.msra.mxu0 %v487
    %573 = vmatpush.msra.mxu0 %v486
    %574 = vmatmul.f32.gmra.mxu0 %v553
    %v575 = vpop.f32.mrf.mxu0
    %v576 = vadd.f32 0.0, %v575
    %577 = vmatmul.f32.gmra.mxu0 %v556
    %v578 = vpop.f32.mrf.mxu0
    %v579 = vadd.f32 0.0, %v578
    %580 = vdwg.mxu0
    %v581 = vmul.f32 %v518, %v40
    %v582 = vmul.f32 %v521, %v41
    %v583 = vmul.f32 %v518, %v42
    %v584 = vmul.f32 %v521, %v43
    %v585 = vmul.f32 %v518, %v44
    %v586 = vmul.f32 %v521, %v45
    %v587 = vmul.f32 %v518, %v46
    %v588 = vmul.f32 %v521, %v47
    %v590 = vsel %vm66, %v581, 0
    %v593 = vsel %vm66, %v582, 0
    %v596 = vsel %vm66, %v583, 0
    %v599 = vsel %vm66, %v584, 0
    %v602 = vsel %vm66, %v585, 0
    %v605 = vsel %vm66, %v586, 0
    %v608 = vsel %vm66, %v587, 0
    %v611 = vsel %vm66, %v588, 0
    %v614 = vsel %vm66, %v547, 0
    %v617 = vsel %vm66, %v550, 0
    %619 = vmatpush.xpose.msra.mxu0 0.0
    %620 = vmatpush.xpose.msra.mxu0 0.0
    %621 = vmatpush.xpose.msra.mxu0 0.0
    %622 = vmatpush.xpose.msra.mxu0 0.0
    %623 = vmatpush.xpose.msra.mxu0 0.0
    %624 = vmatpush.xpose.msra.mxu0 0.0
    %625 = vmatpush.xpose.msra.mxu0 0.0
    %626 = vmatpush.xpose.msra.mxu0 0.0
    %627 = vmatpush.xpose.msra.mxu0 0.0
    %628 = vmatpush.xpose.msra.mxu0 0.0
    %629 = vmatpush.xpose.msra.mxu0 0.0
    %630 = vmatpush.xpose.msra.mxu0 0.0
    %631 = vmatpush.xpose.msra.mxu0 0.0
    %632 = vmatpush.xpose.msra.mxu0 0.0
    %633 = vmatpush.xpose.msra.mxu0 %v617
    %634 = vmatpush.xpose.msra.mxu0 %v614
    %635 = vmatmul.f32.gmra.mxu0 %v590
    %v636 = vpop.f32.mrf.mxu0
    %v637 = vadd.f32 %v32, %v636
    %638 = vmatmul.f32.gmra.mxu0 %v593
    %v639 = vpop.f32.mrf.mxu0
    %v640 = vadd.f32 %v33, %v639
    %641 = vmatmul.f32.gmra.mxu0 %v596
    %v642 = vpop.f32.mrf.mxu0
    %v643 = vadd.f32 %v34, %v642
    %644 = vmatmul.f32.gmra.mxu0 %v599
    %v645 = vpop.f32.mrf.mxu0
    %v646 = vadd.f32 %v35, %v645
    %647 = vmatmul.f32.gmra.mxu0 %v602
    %v648 = vpop.f32.mrf.mxu0
    %v649 = vadd.f32 %v36, %v648
    %650 = vmatmul.f32.gmra.mxu0 %v605
    %v651 = vpop.f32.mrf.mxu0
    %v652 = vadd.f32 %v37, %v651
    %653 = vmatmul.f32.gmra.mxu0 %v608
    %v654 = vpop.f32.mrf.mxu0
    %v655 = vadd.f32 %v38, %v654
    %656 = vmatmul.f32.gmra.mxu0 %v611
    %v657 = vpop.f32.mrf.mxu0
    %v658 = vadd.f32 %v39, %v657
    %659 = vdwg.mxu0
    %v660 = vsel %vm221, %v637, -inf
    %661 = vmax.xlane.f32.xlu0 %v660
    %v662 = vpop.xlane.xlu0 %661
    %v663 = vsel %vm221, %v640, -inf
    %664 = vmax.xlane.f32.xlu0 %v663
    %v665 = vpop.xlane.xlu0 %664
    %v666 = vsel %vm221, %v643, -inf
    %667 = vmax.xlane.f32.xlu0 %v666
    %v668 = vpop.xlane.xlu0 %667
    %v669 = vsel %vm221, %v646, -inf
    %670 = vmax.xlane.f32.xlu0 %v669
    %v671 = vpop.xlane.xlu0 %670
    %v672 = vsel %vm221, %v649, -inf
    %673 = vmax.xlane.f32.xlu0 %v672
    %v674 = vpop.xlane.xlu0 %673
    %v675 = vsel %vm221, %v652, -inf
    %676 = vmax.xlane.f32.xlu0 %v675
    %v677 = vpop.xlane.xlu0 %676
    %v678 = vsel %vm221, %v655, -inf
    %679 = vmax.xlane.f32.xlu0 %v678
    %v680 = vpop.xlane.xlu0 %679
    %v681 = vsel %vm221, %v658, -inf
    %682 = vmax.xlane.f32.xlu0 %v681
    %v683 = vpop.xlane.xlu0 %682
    %v684 = vsub.f32 %v637, %v662
    %v685 = vsub.f32 %v640, %v665
    %v686 = vsub.f32 %v643, %v668
    %v687 = vsub.f32 %v646, %v671
    %v688 = vsub.f32 %v649, %v674
    %v689 = vsub.f32 %v652, %v677
    %v690 = vsub.f32 %v655, %v680
    %v691 = vsub.f32 %v658, %v683
    %v692 = vmul.f32 %v684, 1.442695
    %v693 = vpow.pop %v692
    %v694 = vmul.f32 %v685, 1.442695
    %v695 = vpow.pop %v694
    %v696 = vmul.f32 %v686, 1.442695
    %v697 = vpow.pop %v696
    %v698 = vmul.f32 %v687, 1.442695
    %v699 = vpow.pop %v698
    %v700 = vmul.f32 %v688, 1.442695
    %v701 = vpow.pop %v700
    %v702 = vmul.f32 %v689, 1.442695
    %v703 = vpow.pop %v702
    %v704 = vmul.f32 %v690, 1.442695
    %v705 = vpow.pop %v704
    %v706 = vmul.f32 %v691, 1.442695
    %v707 = vpow.pop %v706
    %v708 = vsel %vm221, %v693, 0.0
    %709 = vadd.xlane.f32.xlu0 %v708
    %v710 = vpop.xlane.xlu0 %709
    %v711 = vsel %vm221, %v695, 0.0
    %712 = vadd.xlane.f32.xlu0 %v711
    %v713 = vpop.xlane.xlu0 %712
    %v714 = vsel %vm221, %v697, 0.0
    %715 = vadd.xlane.f32.xlu0 %v714
    %v716 = vpop.xlane.xlu0 %715
    %v717 = vsel %vm221, %v699, 0.0
    %718 = vadd.xlane.f32.xlu0 %v717
    %v719 = vpop.xlane.xlu0 %718
    %v720 = vsel %vm221, %v701, 0.0
    %721 = vadd.xlane.f32.xlu0 %v720
    %v722 = vpop.xlane.xlu0 %721
    %v723 = vsel %vm221, %v703, 0.0
    %724 = vadd.xlane.f32.xlu0 %v723
    %v725 = vpop.xlane.xlu0 %724
    %v726 = vsel %vm221, %v705, 0.0
    %727 = vadd.xlane.f32.xlu0 %v726
    %v728 = vpop.xlane.xlu0 %727
    %v729 = vsel %vm221, %v707, 0.0
    %730 = vadd.xlane.f32.xlu0 %v729
    %v731 = vpop.xlane.xlu0 %730
    %v732 = vrcp.pop %v710
    %v733 = vrcp.pop %v713
    %v734 = vrcp.pop %v716
    %v735 = vrcp.pop %v719
    %v736 = vrcp.pop %v722
    %v737 = vrcp.pop %v725
    %v738 = vrcp.pop %v728
    %v739 = vrcp.pop %v731
    %v740 = vmul.f32 %v693, %v732
    %v741 = vmul.f32 %v695, %v733
    %v742 = vmul.f32 %v697, %v734
    %v743 = vmul.f32 %v699, %v735
    %v744 = vmul.f32 %v701, %v736
    %v745 = vmul.f32 %v703, %v737
    %v746 = vmul.f32 %v705, %v738
    %v747 = vmul.f32 %v707, %v739
    %v749 = vsel %vm221, %v740, 0
    %v752 = vsel %vm221, %v741, 0
    %v755 = vsel %vm221, %v742, 0
    %v758 = vsel %vm221, %v743, 0
    %v761 = vsel %vm221, %v744, 0
    %v764 = vsel %vm221, %v745, 0
    %v767 = vsel %vm221, %v746, 0
    %v770 = vsel %vm221, %v747, 0
    %772 = vmatpush.msra.mxu0 0.0
    %773 = vmatpush.msra.mxu0 0.0
    %774 = vmatpush.msra.mxu0 0.0
    %775 = vmatpush.msra.mxu0 0.0
    %776 = vmatpush.msra.mxu0 0.0
    %777 = vmatpush.msra.mxu0 0.0
    %778 = vmatpush.msra.mxu0 0.0
    %779 = vmatpush.msra.mxu0 0.0
    %780 = vmatpush.msra.mxu0 0.0
    %781 = vmatpush.msra.mxu0 0.0
    %782 = vmatpush.msra.mxu0 0.0
    %783 = vmatpush.msra.mxu0 0.0
    %784 = vmatpush.msra.mxu0 0.0
    %785 = vmatpush.msra.mxu0 0.0
    %786 = vmatpush.msra.mxu0 %v579
    %787 = vmatpush.msra.mxu0 %v576
    %788 = vmatmul.f32.gmra.mxu0 %v749
    %v789 = vpop.f32.mrf.mxu0
    %v790 = vadd.f32 0.0, %v789
    %791 = vmatmul.f32.gmra.mxu0 %v752
    %v792 = vpop.f32.mrf.mxu0
    %v793 = vadd.f32 0.0, %v792
    %794 = vmatmul.f32.gmra.mxu0 %v755
    %v795 = vpop.f32.mrf.mxu0
    %v796 = vadd.f32 0.0, %v795
    %797 = vmatmul.f32.gmra.mxu0 %v758
    %v798 = vpop.f32.mrf.mxu0
    %v799 = vadd.f32 0.0, %v798
    %800 = vmatmul.f32.gmra.mxu0 %v761
    %v801 = vpop.f32.mrf.mxu0
    %v802 = vadd.f32 0.0, %v801
    %803 = vmatmul.f32.gmra.mxu0 %v764
    %v804 = vpop.f32.mrf.mxu0
    %v805 = vadd.f32 0.0, %v804
    %806 = vmatmul.f32.gmra.mxu0 %v767
    %v807 = vpop.f32.mrf.mxu0
    %v808 = vadd.f32 0.0, %v807
    %809 = vmatmul.f32.gmra.mxu0 %v770
    %v810 = vpop.f32.mrf.mxu0
    %v811 = vadd.f32 0.0, %v810
    %812 = vdwg.mxu0
    %v813 = vmul.f32 %v790, %v40
    %v814 = vmul.f32 %v793, %v41
    %v815 = vmul.f32 %v796, %v42
    %v816 = vmul.f32 %v799, %v43
    %v817 = vmul.f32 %v802, %v44
    %v818 = vmul.f32 %v805, %v45
    %v819 = vmul.f32 %v808, %v46
    %v820 = vmul.f32 %v811, %v47
    %v821 = vadd.f32 %v813, %v815
    %v822 = vadd.f32 %v814, %v816
    %v823 = vadd.f32 %v821, %v817
    %v824 = vadd.f32 %v822, %v818
    %v825 = vadd.f32 %v823, %v819
    %v826 = vadd.f32 %v824, %v820
    %v827 = vperm.slane %v48, 7
    %v829 = vsel %vm66, %v825, 0
    %v832 = vsel %vm66, %v826, 0
    %834 = vmatpush.msra.mxu0 0.0
    %835 = vmatpush.msra.mxu0 0.0
    %836 = vmatpush.msra.mxu0 0.0
    %837 = vmatpush.msra.mxu0 0.0
    %838 = vmatpush.msra.mxu0 0.0
    %839 = vmatpush.msra.mxu0 0.0
    %840 = vmatpush.msra.mxu0 0.0
    %841 = vmatpush.msra.mxu0 0.0
    %842 = vmatpush.msra.mxu0 0.0
    %843 = vmatpush.msra.mxu0 0.0
    %844 = vmatpush.msra.mxu0 0.0
    %845 = vmatpush.msra.mxu0 0.0
    %846 = vmatpush.msra.mxu0 %v493
    %847 = vmatpush.msra.mxu0 %v492
    %848 = vmatpush.msra.mxu0 %v491
    %849 = vmatpush.msra.mxu0 %v490
    %850 = vmatmul.f32.gmra.mxu0 %v829
    %v851 = vpop.f32.mrf.mxu0
    %v852 = vadd.f32 %v827, %v851
    %853 = vmatmul.f32.gmra.mxu0 %v832
    %v854 = vpop.f32.mrf.mxu0
    %v855 = vadd.f32 %v827, %v854
    %856 = vdwg.mxu0
    %v857 = vadd.f32 %v852, %v476
    %v858 = vadd.f32 %v855, %v477
    %v859 = vsel %vm66, %v857, 0.0
    %860 = vadd.xlane.f32.xlu0 %v859
    %v861 = vpop.xlane.xlu0 %860
    %v862 = vsel %vm66, %v858, 0.0
    %863 = vadd.xlane.f32.xlu0 %v862
    %v864 = vpop.xlane.xlu0 %863
    %v865 = vmul.f32 %v861, %v433
    %v866 = vmul.f32 %v864, %v433
    %v867 = vsub.f32 %v857, %v865
    %v868 = vsub.f32 %v858, %v866
    %v869 = vmul.f32 %v867, %v867
    %v870 = vmul.f32 %v868, %v868
    %v871 = vsel %vm66, %v869, 0.0
    %872 = vadd.xlane.f32.xlu0 %v871
    %v873 = vpop.xlane.xlu0 %872
    %v874 = vsel %vm66, %v870, 0.0
    %875 = vadd.xlane.f32.xlu0 %v874
    %v876 = vpop.xlane.xlu0 %875
    %v877 = vmul.f32 %v873, %v433
    %v878 = vmul.f32 %v876, %v433
    %v879 = vadd.f32 %v877, 1e-05
    %v880 = vadd.f32 %v878, 1e-05
    %v881 = vrsqrt.pop %v879
    %v882 = vmul.f32 %v881, %v879
    %v883 = vmul.f32 %v882, %v881
    %v884 = vmul.f32 0.5, %v883
    %v885 = vsub.f32 1.5, %v884
    %v886 = vmul.f32 %v881, %v885
    %vm887 = vweird.f32 %v879
    %vm888 = vweird.f32 %v881
    %vm889 = vmor %vm887, %vm888
    %v890 = vsel %vm889, %v881, %v886
    %v891 = vrsqrt.pop %v880
    %v892 = vmul.f32 %v891, %v880
    %v893 = vmul.f32 %v892, %v891
    %v894 = vmul.f32 0.5, %v893
    %v895 = vsub.f32 1.5, %v894
    %v896 = vmul.f32 %v891, %v895
    %vm897 = vweird.f32 %v880
    %vm898 = vweird.f32 %v891
    %vm899 = vmor %vm897, %vm898
    %v900 = vsel %vm899, %v891, %v896
    %v901 = vmul.f32 %v867, %v890
    %v902 = vmul.f32 %v868, %v900
    %v903 = vperm.slane %v48, 2
    %v904 = vmul.f32 %v901, %v903
    %v905 = vmul.f32 %v902, %v903
    %v906 = vperm.slane %v48, 3
    %v907 = vadd.f32 %v904, %v906
    %v908 = vadd.f32 %v905, %v906
    %v909 = vld [vmem:[%s3] sm:$0xff]
    %v910 = vld [vmem:[%s3 + $0x8] sm:$0xff]
    %v911 = vld [vmem:[%s3 + $0x10] sm:$0xff]
    %v912 = vld [vmem:[%s3 + $0x18] sm:$0xff]
    %v913 = vld [vmem:[%s3 + $0x20] sm:$0x1]
    %v914 = vperm.slane %v913, 0
    %v916 = vsel %vm66, %v907, 0
    %v919 = vsel %vm66, %v908, 0
    %921 = vmatpush.msra.mxu0 0.0
    %922 = vmatpush.msra.mxu0 0.0
    %923 = vmatpush.msra.mxu0 0.0
    %924 = vmatpush.msra.mxu0 0.0
    %925 = vmatpush.msra.mxu0 0.0
    %926 = vmatpush.msra.mxu0 0.0
    %927 = vmatpush.msra.mxu0 0.0
    %928 = vmatpush.msra.mxu0 0.0
    %929 = vmatpush.msra.mxu0 0.0
    %930 = vmatpush.msra.mxu0 0.0
    %931 = vmatpush.msra.mxu0 0.0
    %932 = vmatpush.msra.mxu0 0.0
    %933 = vmatpush.msra.mxu0 %v912
    %934 = vmatpush.msra.mxu0 %v911
    %935 = vmatpush.msra.mxu0 %v910
    %936 = vmatpush.msra.mxu0 %v909
    %937 = vmatmul.f32.gmra.mxu0 %v916
    %v938 = vpop.f32.mrf.mxu0
    %v939 = vadd.f32 %v914, %v938
    %940 = vmatmul.f32.gmra.mxu0 %v919
    %v941 = vpop.f32.mrf.mxu0
    %v942 = vadd.f32 %v914, %v941
    %943 = vdwg.mxu0
    %v944 = vmax.f32 %v939, 0.0
    %v945 = vmax.f32 %v942, 0.0
    %v946 = vld [vmem:[%s2 + $0x100] sm:$0xff]
    %v947 = vld [vmem:[%s2 + $0x108] sm:$0xff]
    %v948 = vld [vmem:[%s2 + $0x110] sm:$0xff]
    %v949 = vld [vmem:[%s2 + $0x118] sm:$0xff]
    %v950 = vld [vmem:[%s2 + $0x120] sm:$0xff]
    %v951 = vld [vmem:[%s2 + $0x128] sm:$0xff]
    %v952 = vld [vmem:[%s2 + $0x130] sm:$0xff]
    %v953 = vld [vmem:[%s2 + $0x138] sm:$0xff]
    %v954 = vld [vmem:[%s2 + $0x140] sm:$0xff]
    %v955 = vld [vmem:[%s2 + $0x148] sm:$0xff]
    %v956 = vld [vmem:[%s2 + $0x150] sm:$0xff]
    %v957 = vld [vmem:[%s2 + $0x158] sm:$0xff]
    %v958 = vld [vmem:[%s2 + $0x160] sm:$0xff]
    %v959 = vld [vmem:[%s2 + $0x168] sm:$0xff]
    %v960 = vld [vmem:[%s2 + $0x170] sm:$0xff]
    %v961 = vld [vmem:[%s2 + $0x178] sm:$0xff]
    %v962 = vperm.slane %v49, 0
    %963 = vmatpush.msra.mxu0 %v961
    %964 = vmatpush.msra.mxu0 %v960
    %965 = vmatpush.msra.mxu0 %v959
    %966 = vmatpush.msra.mxu0 %v958
    %967 = vmatpush.msra.mxu0 %v957
    %968 = vmatpush.msra.mxu0 %v956
    %969 = vmatpush.msra.mxu0 %v955
    %970 = vmatpush.msra.mxu0 %v954
    %971 = vmatpush.msra.mxu0 %v953
    %972 = vmatpush.msra.mxu0 %v952
    %973 = vmatpush.msra.mxu0 %v951
    %974 = vmatpush.msra.mxu0 %v950
    %975 = vmatpush.msra.mxu0 %v949
    %976 = vmatpush.msra.mxu0 %v948
    %977 = vmatpush.msra.mxu0 %v947
    %978 = vmatpush.msra.mxu0 %v946
    %979 = vmatmul.f32.gmra.mxu0 %v944
    %v980 = vpop.f32.mrf.mxu0
    %v981 = vadd.f32 %v962, %v980
    %982 = vmatmul.f32.gmra.mxu0 %v945
    %v983 = vpop.f32.mrf.mxu0
    %v984 = vadd.f32 %v962, %v983
    %985 = vdwg.mxu0
    %v986 = vadd.f32 %v981, %v907
    %v987 = vadd.f32 %v984, %v908
    %v988 = vsel %vm66, %v986, 0.0
    %989 = vadd.xlane.f32.xlu0 %v988
    %v990 = vpop.xlane.xlu0 %989
    %v991 = vsel %vm66, %v987, 0.0
    %992 = vadd.xlane.f32.xlu0 %v991
    %v993 = vpop.xlane.xlu0 %992
    %v994 = vmul.f32 %v990, %v433
    %v995 = vmul.f32 %v993, %v433
    %v996 = vsub.f32 %v986, %v994
    %v997 = vsub.f32 %v987, %v995
    %v998 = vmul.f32 %v996, %v996
    %v999 = vmul.f32 %v997, %v997
    %v1000 = vsel %vm66, %v998, 0.0
    %1001 = vadd.xlane.f32.xlu0 %v1000
    %v1002 = vpop.xlane.xlu0 %1001
    %v1003 = vsel %vm66, %v999, 0.0
    %1004 = vadd.xlane.f32.xlu0 %v1003
    %v1005 = vpop.xlane.xlu0 %1004
    %v1006 = vmul.f32 %v1002, %v433
    %v1007 = vmul.f32 %v1005, %v433
    %v1008 = vadd.f32 %v1006, 1e-05
    %v1009 = vadd.f32 %v1007, 1e-05
    %v1010 = vrsqrt.pop %v1008
    %v1011 = vmul.f32 %v1010, %v1008
    %v1012 = vmul.f32 %v1011, %v1010
    %v1013 = vmul.f32 0.5, %v1012
    %v1014 = vsub.f32 1.5, %v1013
    %v1015 = vmul.f32 %v1010, %v1014
    %vm1016 = vweird.f32 %v1008
    %vm1017 = vweird.f32 %v1010
    %vm1018 = vmor %vm1016, %vm1017
    %v1019 = vsel %vm1018, %v1010, %v1015
    %v1020 = vrsqrt.pop %v1009
    %v1021 = vmul.f32 %v1020, %v1009
    %v1022 = vmul.f32 %v1021, %v1020
    %v1023 = vmul.f32 0.5, %v1022
    %v1024 = vsub.f32 1.5, %v1023
    %v1025 = vmul.f32 %v1020, %v1024
    %vm1026 = vweird.f32 %v1009
    %vm1027 = vweird.f32 %v1020
    %vm1028 = vmor %vm1026, %vm1027
    %v1029 = vsel %vm1028, %v1020, %v1025
    %v1030 = vmul.f32 %v996, %v1019
    %v1031 = vmul.f32 %v997, %v1029
    %v1032 = vperm.slane %v48, 4
    %v1033 = vmul.f32 %v1030, %v1032
    %v1034 = vmul.f32 %v1031, %v1032
    %v1035 = vperm.slane %v48, 5
    %v1036 = vadd.f32 %v1033, %v1035
    %v1037 = vadd.f32 %v1034, %v1035
    %1038 = vst.msk [vmem:[#allocation2] sm:$0xff] %vm66, %v1036
    %1039 = vst.msk [vmem:[#allocation2 + $0x8] sm:$0xff] %vm66, %v1037
    // Predicated region
    $region18: #{decoder_block_pallas.1} parent=1 // pred_check
      _
    $region19: #{decoder_block_pallas.1} parent=1 // pred_check_branch
      %1041 = sbr.rel (0) target = $region21
    $region20: #{decoder_block_pallas.1} parent=1 // pred_region
      %1043 = vsyncadd [#allocation3], 0
      %s1044 = sshll.u32 [#allocation2], 4
      %s1045 = int_to_ptr.vmem [resolvable:$true] %s1044
      %s1046 = sshll.u32 %s4, 4
      %s1047 = int_to_ptr.hbm [resolvable:$true] %s1046
      %1052 = dma.vmem_to_hbm [thread:$0]  %s1045, 256, %s1047, [#allocation3], 128, 128, 8
    $region21: #{decoder_block_pallas.1} parent=1 // pred_fallthru
      _
    // Predicated region
    $region22: #{decoder_block_pallas.1} parent=1 // pred_check
      _
    $region23: #{decoder_block_pallas.1} parent=1 // pred_check_branch
      %1054 = sbr.rel (0) target = $region25
    $region24: #{decoder_block_pallas.1} parent=1 // pred_region
      %1056 = dma.done [#allocation3], 256
    $region25: #{decoder_block_pallas.1} parent=1 // pred_fallthru
      _
    %1057 = vsyncpa [#allocation3], 1

</llo_original>
